<compile_context>
chip_gen: v7x
topology: tpu7x:2x2x1
jax: 0.10.0
libtpu: 0.0.40
codegen_flags: <defaults>
</compile_context>

<pallas_src>
import functools

import jax
import jax.numpy as jnp
from jax import lax
from jax.experimental import pallas as pl
from jax.experimental.pallas import tpu as pltpu


def _basic_block_kernel(C, x_ref, w1_ref, b1_ref, w2_ref, b2_ref, o_ref,
                        pad_ref, pcol_ref):
    """Fused BasicBlock forward for one batch element (grid axis 0 = batch).

    Layout: channels folded into lanes, i.e. activations are (H, W*C) with the last dim
    on the 128-lane axis (lane-dense).

    x_ref:    (1, H, W*C)      f32   input (also the residual branch)
    w1_ref:   (9*W*C, W*C)     bf16  block-diagonal BN-folded weights of conv1
    b1_ref:   (1, W*C)         f32   BN-folded bias of conv1, tiled along W
    w2_ref:   (9*W*C, W*C)     bf16  block-diagonal BN-folded weights of conv2
    b2_ref:   (1, W*C)         f32   BN-folded bias of conv2, tiled along W
    o_ref:    (1, H, W*C)      f32   output
    pad_ref:  (H+2, (W+2)*C)   f32   VMEM scratch: zero-border padded activation
    pcol_ref: (H, 9*W*C)       bf16  VMEM scratch: lane-dense im2col patch matrix
    """
    _, H, WC = x_ref.shape
    W = WC // C
    WPC = (W + 2) * C                      # flattened padded row width

    def conv3x3(w_ref):
        # im2col: 9 lane-dense shifted windows of the padded activation stacked along K,
        # then a SINGLE MXU dot (K = 9*W*C) against the block-diagonal folded weights,
        # with f32 accumulation.  No per-tap matmuls, no accumulate chain, no reshapes.
        for dy in range(3):
            for dx in range(3):
                k = dy * 3 + dx
                tap = pad_ref[dy:dy + H, dx * C:dx * C + WC]          # (H, W*C) f32
                pcol_ref[:, k * WC:(k + 1) * WC] = tap.astype(pcol_ref.dtype)
        return jnp.dot(pcol_ref[...], w_ref[...],
                       preferred_element_type=jnp.float32)            # (H, W*C) f32

    # ---- zero ONLY the 1-pixel border of the padded scratch (interior is overwritten) ----
    pad_ref[0:1, :] = jnp.zeros((1, WPC), pad_ref.dtype)
    pad_ref[H + 1:H + 2, :] = jnp.zeros((1, WPC), pad_ref.dtype)
    pad_ref[1:H + 1, 0:C] = jnp.zeros((H, C), pad_ref.dtype)
    pad_ref[1:H + 1, C + WC:WPC] = jnp.zeros((H, C), pad_ref.dtype)

    x = x_ref[0]                                                      # (H, W*C) f32, lane-dense

    # ---- conv1 (3x3, stride 1, pad 1) + folded BN + ReLU ----
    pad_ref[1:H + 1, C:C + WC] = x
    h1 = jnp.maximum(conv3x3(w1_ref) + b1_ref[...], 0.0)              # (H, W*C) f32

    # ---- conv2 (3x3, stride 1, pad 1) + folded BN ----
    pad_ref[1:H + 1, C:C + WC] = h1
    a2 = conv3x3(w2_ref) + b2_ref[...]                                # (H, W*C) f32

    # ---- residual add (downsample is None) + lane-dense store ----
    o_ref[0] = a2 + x


def fold_bn(w_hwio, gamma, beta, mean, var, eps=1e-5):
    """Fold eval-mode BatchNorm into conv weights/bias. w_hwio: (3, 3, Cin, Cout)."""
    scale = gamma / jnp.sqrt(var + eps)                   # (Cout,)
    w_f = w_hwio * scale[None, None, None, :]             # per-output-channel scale
    b_f = beta - mean * scale                             # (Cout,)
    return w_f, b_f


def _block_diag_weights(w_flat, W):
    """(9*Cin, Cout) tap-stacked weights -> (9*W*Cin, W*Cout) block-diagonal bf16 weights
    for the channels-folded (W*C on lanes) layout.  Row block k = kron(I_W, W_k)."""
    nine_cin, cout = w_flat.shape
    cin = nine_cin // 9
    eye_w = jnp.eye(W, dtype=w_flat.dtype)
    blocks = [jnp.kron(eye_w, w_flat[k * cin:(k + 1) * cin, :]) for k in range(9)]
    return jnp.concatenate(blocks, axis=0).astype(jnp.bfloat16)       # (9*W*cin, W*cout)


@jax.jit
def basic_block_forward(x_nchw, w1f_hwio, b1f, w2f_hwio, b2f):
    """NCHW in / NCHW out, matching the PyTorch module (stride=1, pad=1, dil=1, no downsample)."""
    # TODO(synk): in a full network keep activations NHWC end-to-end so these two boundary
    # transposes (full HBM relayout passes) disappear into the surrounding graph.
    x = jnp.transpose(x_nchw, (0, 2, 3, 1)).astype(jnp.float32)       # -> NHWC
    B, H, W, Cin = x.shape
    Cout = w1f_hwio.shape[-1]
    assert Cin == Cout, "residual add requires inplanes == planes (downsample is None)"
    WC = W * Cout

    x_flat = x.reshape(B, H, WC)                                      # free reshape, lane-dense

    w1_big = _block_diag_weights(w1f_hwio.reshape(9 * Cin, Cout), W)      # (9*WC, WC) bf16
    w2_big = _block_diag_weights(w2f_hwio.reshape(9 * Cout, Cout), W)     # (9*WC, WC) bf16
    b1_tile = jnp.tile(b1f.reshape(-1), W).reshape(1, WC).astype(jnp.float32)
    b2_tile = jnp.tile(b2f.reshape(-1), W).reshape(1, WC).astype(jnp.float32)

    kernel = functools.partial(_basic_block_kernel, Cout)

    out_flat = pl.pallas_call(
        kernel,
        out_shape=jax.ShapeDtypeStruct((B, H, WC), jnp.float32),
        grid_spec=pltpu.PrefetchScalarGridSpec(
            num_scalar_prefetch=0,
            grid=(B,),
            in_specs=[
                pl.BlockSpec((1, H, WC), lambda b: (b, 0, 0)),        # x: one batch item / step
                pl.BlockSpec((9 * WC, WC), lambda b: (0, 0)),         # weights: VMEM-resident
                pl.BlockSpec((1, WC), lambda b: (0, 0)),              # biases:  VMEM-resident
                pl.BlockSpec((9 * WC, WC), lambda b: (0, 0)),
                pl.BlockSpec((1, WC), lambda b: (0, 0)),
            ],
            out_specs=pl.BlockSpec((1, H, WC), lambda b: (b, 0, 0)),  # lane-dense (last dim 128)
            scratch_shapes=[
                pltpu.VMEM((H + 2, (W + 2) * Cout), jnp.float32),     # padded activation
                pltpu.VMEM((H, 9 * WC), jnp.bfloat16),                # im2col patch matrix
            ],
        ),
        compiler_params=pltpu.CompilerParams(
            dimension_semantics=("parallel",),      # batch grid -> both v7x TensorCores
            vmem_limit_bytes=32 * 1024 * 1024,
        ),
    )(x_flat, w1_big, b1_tile, w2_big, b2_tile)

    out = out_flat.reshape(B, H, W, Cout)                             # free reshape
    return jnp.transpose(out, (0, 3, 1, 2))                           # -> NCHW


def reference_forward(x_nchw, w1f_hwio, b1f, w2f_hwio, b2f):
    """Pure-JAX reference mirroring the kernel's precision policy
    (bf16 conv operands, f32 accumulation, f32 bias / ReLU / residual)."""
    x = jnp.transpose(x_nchw, (0, 2, 3, 1)).astype(jnp.float32)
    dn = ('NHWC', 'HWIO', 'NHWC')
    bf16 = jnp.bfloat16
    y = lax.conv_general_dilated(x.astype(bf16), w1f_hwio.astype(bf16), (1, 1), 'SAME',
                                 dimension_numbers=dn,
                                 preferred_element_type=jnp.float32) + b1f
    y = jnp.maximum(y, 0.0)
    z = lax.conv_general_dilated(y.astype(bf16), w2f_hwio.astype(bf16), (1, 1), 'SAME',
                                 dimension_numbers=dn,
                                 preferred_element_type=jnp.float32) + b2f
    out = z + x
    return jnp.transpose(out, (0, 3, 1, 2))


if __name__ == "__main__":
    # Shapes consistent with the module: inplanes = planes = 8, stride=1, pad=1,
    # dilation=1, downsample=None.  W*C = 16*8 = 128 -> fully lane-dense layout.
    B, C, Hs, Ws = 2, 8, 16, 16
    planes = 8

    key = jax.random.PRNGKey(0)
    (k_x, k_w1, k_w2, k_g1, k_b1, k_m1, k_v1,
     k_g2, k_b2, k_m2, k_v2) = jax.random.split(key, 11)

    x = jax.random.normal(k_x, (B, C, Hs, Ws), jnp.float32)

    # Conv weights in HWIO layout (3, 3, Cin, Cout).
    w1 = 0.1 * jax.random.normal(k_w1, (3, 3, C, planes), jnp.float32)
    w2 = 0.1 * jax.random.normal(k_w2, (3, 3, planes, planes), jnp.float32)

    # BatchNorm (eval-mode) parameters.
    g1 = 1.0 + 0.1 * jax.random.normal(k_g1, (planes,), jnp.float32)
    be1 = 0.1 * jax.random.normal(k_b1, (planes,), jnp.float32)
    m1 = 0.05 * jax.random.normal(k_m1, (planes,), jnp.float32)
    v1 = 1.0 + 0.1 * jax.random.uniform(k_v1, (planes,), jnp.float32)
    g2 = 1.0 + 0.1 * jax.random.normal(k_g2, (planes,), jnp.float32)
    be2 = 0.1 * jax.random.normal(k_b2, (planes,), jnp.float32)
    m2 = 0.05 * jax.random.normal(k_m2, (planes,), jnp.float32)
    v2 = 1.0 + 0.1 * jax.random.uniform(k_v2, (planes,), jnp.float32)

    w1f, b1f = fold_bn(w1, g1, be1, m1, v1)
    w2f, b2f = fold_bn(w2, g2, be2, m2, v2)

    out = jax.block_until_ready(basic_block_forward(x, w1f, b1f, w2f, b2f))
    ref = jax.block_until_ready(reference_forward(x, w1f, b1f, w2f, b2f))

    assert out.shape == (B, planes, Hs, Ws)
    max_err = float(jnp.max(jnp.abs(out - ref)))
    # bf16 matmul operands (f32 accumulation) -> compare against the bf16-mirrored reference.
    assert jnp.allclose(out, ref, atol=1e-2, rtol=1e-2), max_err

    print("KERNEL_OK")
</pallas_src>

<mosaic_0001>
module attributes {stable_mosaic.version = 11 : i64} {
  func.func @_basic_block_kernel(%arg0: i32, %arg1: memref<1x16x128xf32, #tpu.memory_space<vmem>>, %arg2: memref<1152x128xbf16, #tpu.memory_space<vmem>>, %arg3: memref<1x128xf32, #tpu.memory_space<vmem>>, %arg4: memref<1152x128xbf16, #tpu.memory_space<vmem>>, %arg5: memref<1x128xf32, #tpu.memory_space<vmem>>, %arg6: memref<1x16x128xf32, #tpu.memory_space<vmem>>, %arg7: memref<18x144xf32, #tpu.memory_space<vmem>>, %arg8: memref<16x1152xbf16, #tpu.memory_space<vmem>>) attributes {dimension_semantics = [#tpu.dimension_semantics<parallel>], iteration_bounds = array<i64: 2>, scalar_prefetch = 0 : i64, scratch_operands = 2 : i64, tpu.core_type = #tpu.core_type<tc>, window_params = [{transform_indices = @transform_0, window_bounds = array<i64: 1, 16, 128>}, {pipeline_mode = #tpu.pipeline_mode<synchronous>, transform_indices = @transform_1, window_bounds = array<i64: 1152, 128>}, {pipeline_mode = #tpu.pipeline_mode<synchronous>, transform_indices = @transform_2, window_bounds = array<i64: 1, 128>}, {pipeline_mode = #tpu.pipeline_mode<synchronous>, transform_indices = @transform_3, window_bounds = array<i64: 1152, 128>}, {pipeline_mode = #tpu.pipeline_mode<synchronous>, transform_indices = @transform_4, window_bounds = array<i64: 1, 128>}, {transform_indices = @transform_5, window_bounds = array<i64: 1, 16, 128>}]} {
    %cst = arith.constant 0.000000e+00 : f32
    %0 = vector.broadcast %cst : f32 to vector<1x144xf32>
    %c0 = arith.constant 0 : index
    %c0_0 = arith.constant 0 : index
    %1 = vector.load %arg7[%c0, %c0_0] : memref<18x144xf32, #tpu.memory_space<vmem>>, vector<1x144xf32>
    tpu.vector_store %arg7[%c0, %c0_0], %0 {strides = array<i32>} : memref<18x144xf32, #tpu.memory_space<vmem>>, vector<1x144xf32>,
    %cst_1 = arith.constant 0.000000e+00 : f32
    %2 = vector.broadcast %cst_1 : f32 to vector<1x144xf32>
    %c17 = arith.constant 17 : index
    %c0_2 = arith.constant 0 : index
    %3 = vector.load %arg7[%c17, %c0_2] : memref<18x144xf32, #tpu.memory_space<vmem>>, vector<1x144xf32>
    tpu.vector_store %arg7[%c17, %c0_2], %2 {strides = array<i32>} : memref<18x144xf32, #tpu.memory_space<vmem>>, vector<1x144xf32>,
    %cst_3 = arith.constant 0.000000e+00 : f32
    %4 = vector.broadcast %cst_3 : f32 to vector<16x8xf32>
    %c1 = arith.constant 1 : index
    %c0_4 = arith.constant 0 : index
    %5 = vector.load %arg7[%c1, %c0_4] : memref<18x144xf32, #tpu.memory_space<vmem>>, vector<16x8xf32>
    tpu.vector_store %arg7[%c1, %c0_4], %4 {strides = array<i32>} : memref<18x144xf32, #tpu.memory_space<vmem>>, vector<16x8xf32>,
    %cst_5 = arith.constant 0.000000e+00 : f32
    %6 = vector.broadcast %cst_5 : f32 to vector<16x8xf32>
    %c1_6 = arith.constant 1 : index
    %c136 = arith.constant 136 : index
    %7 = vector.load %arg7[%c1_6, %c136] : memref<18x144xf32, #tpu.memory_space<vmem>>, vector<16x8xf32>
    tpu.vector_store %arg7[%c1_6, %c136], %6 {strides = array<i32>} : memref<18x144xf32, #tpu.memory_space<vmem>>, vector<16x8xf32>,
    %c0_7 = arith.constant 0 : index
    %c0_8 = arith.constant 0 : index
    %c0_9 = arith.constant 0 : index
    %8 = vector.load %arg1[%c0_7, %c0_8, %c0_9] : memref<1x16x128xf32, #tpu.memory_space<vmem>>, vector<1x16x128xf32>
    %9 = vector.shape_cast %8 : vector<1x16x128xf32> to vector<16x128xf32>
    %c1_10 = arith.constant 1 : index
    %c8 = arith.constant 8 : index
    %10 = vector.load %arg7[%c1_10, %c8] : memref<18x144xf32, #tpu.memory_space<vmem>>, vector<16x128xf32>
    tpu.vector_store %arg7[%c1_10, %c8], %9 {strides = array<i32>} : memref<18x144xf32, #tpu.memory_space<vmem>>, vector<16x128xf32>,
    %c0_11 = arith.constant 0 : index
    %c0_12 = arith.constant 0 : index
    %11 = vector.load %arg7[%c0_11, %c0_12] : memref<18x144xf32, #tpu.memory_space<vmem>>, vector<16x128xf32>
    %12 = arith.truncf %11 : vector<16x128xf32> to vector<16x128xbf16>
    %c0_13 = arith.constant 0 : index
    %c0_14 = arith.constant 0 : index
    %13 = vector.load %arg8[%c0_13, %c0_14] : memref<16x1152xbf16, #tpu.memory_space<vmem>>, vector<16x128xbf16>
    tpu.vector_store %arg8[%c0_13, %c0_14], %12 {strides = array<i32>} : memref<16x1152xbf16, #tpu.memory_space<vmem>>, vector<16x128xbf16>,
    %c0_15 = arith.constant 0 : index
    %c8_16 = arith.constant 8 : index
    %14 = vector.load %arg7[%c0_15, %c8_16] : memref<18x144xf32, #tpu.memory_space<vmem>>, vector<16x128xf32>
    %15 = arith.truncf %14 : vector<16x128xf32> to vector<16x128xbf16>
    %c0_17 = arith.constant 0 : index
    %c128 = arith.constant 128 : index
    %16 = vector.load %arg8[%c0_17, %c128] : memref<16x1152xbf16, #tpu.memory_space<vmem>>, vector<16x128xbf16>
    tpu.vector_store %arg8[%c0_17, %c128], %15 {strides = array<i32>} : memref<16x1152xbf16, #tpu.memory_space<vmem>>, vector<16x128xbf16>,
    %c0_18 = arith.constant 0 : index
    %c16 = arith.constant 16 : index
    %17 = vector.load %arg7[%c0_18, %c16] : memref<18x144xf32, #tpu.memory_space<vmem>>, vector<16x128xf32>
    %18 = arith.truncf %17 : vector<16x128xf32> to vector<16x128xbf16>
    %c0_19 = arith.constant 0 : index
    %c256 = arith.constant 256 : index
    %19 = vector.load %arg8[%c0_19, %c256] : memref<16x1152xbf16, #tpu.memory_space<vmem>>, vector<16x128xbf16>
    tpu.vector_store %arg8[%c0_19, %c256], %18 {strides = array<i32>} : memref<16x1152xbf16, #tpu.memory_space<vmem>>, vector<16x128xbf16>,
    %c1_20 = arith.constant 1 : index
    %c0_21 = arith.constant 0 : index
    %20 = vector.load %arg7[%c1_20, %c0_21] : memref<18x144xf32, #tpu.memory_space<vmem>>, vector<16x128xf32>
    %21 = arith.truncf %20 : vector<16x128xf32> to vector<16x128xbf16>
    %c0_22 = arith.constant 0 : index
    %c384 = arith.constant 384 : index
    %22 = vector.load %arg8[%c0_22, %c384] : memref<16x1152xbf16, #tpu.memory_space<vmem>>, vector<16x128xbf16>
    tpu.vector_store %arg8[%c0_22, %c384], %21 {strides = array<i32>} : memref<16x1152xbf16, #tpu.memory_space<vmem>>, vector<16x128xbf16>,
    %c1_23 = arith.constant 1 : index
    %c8_24 = arith.constant 8 : index
    %23 = vector.load %arg7[%c1_23, %c8_24] : memref<18x144xf32, #tpu.memory_space<vmem>>, vector<16x128xf32>
    %24 = arith.truncf %23 : vector<16x128xf32> to vector<16x128xbf16>
    %c0_25 = arith.constant 0 : index
    %c512 = arith.constant 512 : index
    %25 = vector.load %arg8[%c0_25, %c512] : memref<16x1152xbf16, #tpu.memory_space<vmem>>, vector<16x128xbf16>
    tpu.vector_store %arg8[%c0_25, %c512], %24 {strides = array<i32>} : memref<16x1152xbf16, #tpu.memory_space<vmem>>, vector<16x128xbf16>,
    %c1_26 = arith.constant 1 : index
    %c16_27 = arith.constant 16 : index
    %26 = vector.load %arg7[%c1_26, %c16_27] : memref<18x144xf32, #tpu.memory_space<vmem>>, vector<16x128xf32>
    %27 = arith.truncf %26 : vector<16x128xf32> to vector<16x128xbf16>
    %c0_28 = arith.constant 0 : index
    %c640 = arith.constant 640 : index
    %28 = vector.load %arg8[%c0_28, %c640] : memref<16x1152xbf16, #tpu.memory_space<vmem>>, vector<16x128xbf16>
    tpu.vector_store %arg8[%c0_28, %c640], %27 {strides = array<i32>} : memref<16x1152xbf16, #tpu.memory_space<vmem>>, vector<16x128xbf16>,
    %c2 = arith.constant 2 : index
    %c0_29 = arith.constant 0 : index
    %29 = vector.load %arg7[%c2, %c0_29] : memref<18x144xf32, #tpu.memory_space<vmem>>, vector<16x128xf32>
    %30 = arith.truncf %29 : vector<16x128xf32> to vector<16x128xbf16>
    %c0_30 = arith.constant 0 : index
    %c768 = arith.constant 768 : index
    %31 = vector.load %arg8[%c0_30, %c768] : memref<16x1152xbf16, #tpu.memory_space<vmem>>, vector<16x128xbf16>
    tpu.vector_store %arg8[%c0_30, %c768], %30 {strides = array<i32>} : memref<16x1152xbf16, #tpu.memory_space<vmem>>, vector<16x128xbf16>,
    %c2_31 = arith.constant 2 : index
    %c8_32 = arith.constant 8 : index
    %32 = vector.load %arg7[%c2_31, %c8_32] : memref<18x144xf32, #tpu.memory_space<vmem>>, vector<16x128xf32>
    %33 = arith.truncf %32 : vector<16x128xf32> to vector<16x128xbf16>
    %c0_33 = arith.constant 0 : index
    %c896 = arith.constant 896 : index
    %34 = vector.load %arg8[%c0_33, %c896] : memref<16x1152xbf16, #tpu.memory_space<vmem>>, vector<16x128xbf16>
    tpu.vector_store %arg8[%c0_33, %c896], %33 {strides = array<i32>} : memref<16x1152xbf16, #tpu.memory_space<vmem>>, vector<16x128xbf16>,
    %c2_34 = arith.constant 2 : index
    %c16_35 = arith.constant 16 : index
    %35 = vector.load %arg7[%c2_34, %c16_35] : memref<18x144xf32, #tpu.memory_space<vmem>>, vector<16x128xf32>
    %36 = arith.truncf %35 : vector<16x128xf32> to vector<16x128xbf16>
    %c0_36 = arith.constant 0 : index
    %c1024 = arith.constant 1024 : index
    %37 = vector.load %arg8[%c0_36, %c1024] : memref<16x1152xbf16, #tpu.memory_space<vmem>>, vector<16x128xbf16>
    tpu.vector_store %arg8[%c0_36, %c1024], %36 {strides = array<i32>} : memref<16x1152xbf16, #tpu.memory_space<vmem>>, vector<16x128xbf16>,
    %c0_37 = arith.constant 0 : index
    %c0_38 = arith.constant 0 : index
    %38 = vector.load %arg8[%c0_37, %c0_38] : memref<16x1152xbf16, #tpu.memory_space<vmem>>, vector<16x1152xbf16>
    %c0_39 = arith.constant 0 : index
    %c0_40 = arith.constant 0 : index
    %39 = vector.load %arg2[%c0_39, %c0_40] : memref<1152x128xbf16, #tpu.memory_space<vmem>>, vector<1152x128xbf16>
    %cst_41 = arith.constant dense<0.000000e+00> : vector<16x128xf32>
    %40 = tpu.matmul %38, %39, %cst_41 {dimension_numbers = #tpu.dot_dimension_numbers<[1], [0], [0], [1], [0, 0, 1, 1], [], []>} : vector<16x1152xbf16>, vector<1152x128xbf16>, vector<16x128xf32> -> vector<16x128xf32>
    %c0_42 = arith.constant 0 : index
    %c0_43 = arith.constant 0 : index
    %41 = vector.load %arg3[%c0_42, %c0_43] : memref<1x128xf32, #tpu.memory_space<vmem>>, vector<1x128xf32>
    %42 = vector.broadcast %41 : vector<1x128xf32> to vector<16x128xf32>
    %43 = arith.addf %40, %42 : vector<16x128xf32>
    %cst_44 = arith.constant 0.000000e+00 : f32
    %44 = vector.broadcast %cst_44 : f32 to vector<16x128xf32>
    %45 = arith.maximumf %43, %44 : vector<16x128xf32>
    %c1_45 = arith.constant 1 : index
    %c8_46 = arith.constant 8 : index
    %46 = vector.load %arg7[%c1_45, %c8_46] : memref<18x144xf32, #tpu.memory_space<vmem>>, vector<16x128xf32>
    tpu.vector_store %arg7[%c1_45, %c8_46], %45 {strides = array<i32>} : memref<18x144xf32, #tpu.memory_space<vmem>>, vector<16x128xf32>,
    %c0_47 = arith.constant 0 : index
    %c0_48 = arith.constant 0 : index
    %47 = vector.load %arg7[%c0_47, %c0_48] : memref<18x144xf32, #tpu.memory_space<vmem>>, vector<16x128xf32>
    %48 = arith.truncf %47 : vector<16x128xf32> to vector<16x128xbf16>
    %c0_49 = arith.constant 0 : index
    %c0_50 = arith.constant 0 : index
    %49 = vector.load %arg8[%c0_49, %c0_50] : memref<16x1152xbf16, #tpu.memory_space<vmem>>, vector<16x128xbf16>
    tpu.vector_store %arg8[%c0_49, %c0_50], %48 {strides = array<i32>} : memref<16x1152xbf16, #tpu.memory_space<vmem>>, vector<16x128xbf16>,
    %c0_51 = arith.constant 0 : index
    %c8_52 = arith.constant 8 : index
    %50 = vector.load %arg7[%c0_51, %c8_52] : memref<18x144xf32, #tpu.memory_space<vmem>>, vector<16x128xf32>
    %51 = arith.truncf %50 : vector<16x128xf32> to vector<16x128xbf16>
    %c0_53 = arith.constant 0 : index
    %c128_54 = arith.constant 128 : index
    %52 = vector.load %arg8[%c0_53, %c128_54] : memref<16x1152xbf16, #tpu.memory_space<vmem>>, vector<16x128xbf16>
    tpu.vector_store %arg8[%c0_53, %c128_54], %51 {strides = array<i32>} : memref<16x1152xbf16, #tpu.memory_space<vmem>>, vector<16x128xbf16>,
    %c0_55 = arith.constant 0 : index
    %c16_56 = arith.constant 16 : index
    %53 = vector.load %arg7[%c0_55, %c16_56] : memref<18x144xf32, #tpu.memory_space<vmem>>, vector<16x128xf32>
    %54 = arith.truncf %53 : vector<16x128xf32> to vector<16x128xbf16>
    %c0_57 = arith.constant 0 : index
    %c256_58 = arith.constant 256 : index
    %55 = vector.load %arg8[%c0_57, %c256_58] : memref<16x1152xbf16, #tpu.memory_space<vmem>>, vector<16x128xbf16>
    tpu.vector_store %arg8[%c0_57, %c256_58], %54 {strides = array<i32>} : memref<16x1152xbf16, #tpu.memory_space<vmem>>, vector<16x128xbf16>,
    %c1_59 = arith.constant 1 : index
    %c0_60 = arith.constant 0 : index
    %56 = vector.load %arg7[%c1_59, %c0_60] : memref<18x144xf32, #tpu.memory_space<vmem>>, vector<16x128xf32>
    %57 = arith.truncf %56 : vector<16x128xf32> to vector<16x128xbf16>
    %c0_61 = arith.constant 0 : index
    %c384_62 = arith.constant 384 : index
    %58 = vector.load %arg8[%c0_61, %c384_62] : memref<16x1152xbf16, #tpu.memory_space<vmem>>, vector<16x128xbf16>
    tpu.vector_store %arg8[%c0_61, %c384_62], %57 {strides = array<i32>} : memref<16x1152xbf16, #tpu.memory_space<vmem>>, vector<16x128xbf16>,
    %c1_63 = arith.constant 1 : index
    %c8_64 = arith.constant 8 : index
    %59 = vector.load %arg7[%c1_63, %c8_64] : memref<18x144xf32, #tpu.memory_space<vmem>>, vector<16x128xf32>
    %60 = arith.truncf %59 : vector<16x128xf32> to vector<16x128xbf16>
    %c0_65 = arith.constant 0 : index
    %c512_66 = arith.constant 512 : index
    %61 = vector.load %arg8[%c0_65, %c512_66] : memref<16x1152xbf16, #tpu.memory_space<vmem>>, vector<16x128xbf16>
    tpu.vector_store %arg8[%c0_65, %c512_66], %60 {strides = array<i32>} : memref<16x1152xbf16, #tpu.memory_space<vmem>>, vector<16x128xbf16>,
    %c1_67 = arith.constant 1 : index
    %c16_68 = arith.constant 16 : index
    %62 = vector.load %arg7[%c1_67, %c16_68] : memref<18x144xf32, #tpu.memory_space<vmem>>, vector<16x128xf32>
    %63 = arith.truncf %62 : vector<16x128xf32> to vector<16x128xbf16>
    %c0_69 = arith.constant 0 : index
    %c640_70 = arith.constant 640 : index
    %64 = vector.load %arg8[%c0_69, %c640_70] : memref<16x1152xbf16, #tpu.memory_space<vmem>>, vector<16x128xbf16>
    tpu.vector_store %arg8[%c0_69, %c640_70], %63 {strides = array<i32>} : memref<16x1152xbf16, #tpu.memory_space<vmem>>, vector<16x128xbf16>,
    %c2_71 = arith.constant 2 : index
    %c0_72 = arith.constant 0 : index
    %65 = vector.load %arg7[%c2_71, %c0_72] : memref<18x144xf32, #tpu.memory_space<vmem>>, vector<16x128xf32>
    %66 = arith.truncf %65 : vector<16x128xf32> to vector<16x128xbf16>
    %c0_73 = arith.constant 0 : index
    %c768_74 = arith.constant 768 : index
    %67 = vector.load %arg8[%c0_73, %c768_74] : memref<16x1152xbf16, #tpu.memory_space<vmem>>, vector<16x128xbf16>
    tpu.vector_store %arg8[%c0_73, %c768_74], %66 {strides = array<i32>} : memref<16x1152xbf16, #tpu.memory_space<vmem>>, vector<16x128xbf16>,
    %c2_75 = arith.constant 2 : index
    %c8_76 = arith.constant 8 : index
    %68 = vector.load %arg7[%c2_75, %c8_76] : memref<18x144xf32, #tpu.memory_space<vmem>>, vector<16x128xf32>
    %69 = arith.truncf %68 : vector<16x128xf32> to vector<16x128xbf16>
    %c0_77 = arith.constant 0 : index
    %c896_78 = arith.constant 896 : index
    %70 = vector.load %arg8[%c0_77, %c896_78] : memref<16x1152xbf16, #tpu.memory_space<vmem>>, vector<16x128xbf16>
    tpu.vector_store %arg8[%c0_77, %c896_78], %69 {strides = array<i32>} : memref<16x1152xbf16, #tpu.memory_space<vmem>>, vector<16x128xbf16>,
    %c2_79 = arith.constant 2 : index
    %c16_80 = arith.constant 16 : index
    %71 = vector.load %arg7[%c2_79, %c16_80] : memref<18x144xf32, #tpu.memory_space<vmem>>, vector<16x128xf32>
    %72 = arith.truncf %71 : vector<16x128xf32> to vector<16x128xbf16>
    %c0_81 = arith.constant 0 : index
    %c1024_82 = arith.constant 1024 : index
    %73 = vector.load %arg8[%c0_81, %c1024_82] : memref<16x1152xbf16, #tpu.memory_space<vmem>>, vector<16x128xbf16>
    tpu.vector_store %arg8[%c0_81, %c1024_82], %72 {strides = array<i32>} : memref<16x1152xbf16, #tpu.memory_space<vmem>>, vector<16x128xbf16>,
    %c0_83 = arith.constant 0 : index
    %c0_84 = arith.constant 0 : index
    %74 = vector.load %arg8[%c0_83, %c0_84] : memref<16x1152xbf16, #tpu.memory_space<vmem>>, vector<16x1152xbf16>
    %c0_85 = arith.constant 0 : index
    %c0_86 = arith.constant 0 : index
    %75 = vector.load %arg4[%c0_85, %c0_86] : memref<1152x128xbf16, #tpu.memory_space<vmem>>, vector<1152x128xbf16>
    %cst_87 = arith.constant dense<0.000000e+00> : vector<16x128xf32>
    %76 = tpu.matmul %74, %75, %cst_87 {dimension_numbers = #tpu.dot_dimension_numbers<[1], [0], [0], [1], [0, 0, 1, 1], [], []>} : vector<16x1152xbf16>, vector<1152x128xbf16>, vector<16x128xf32> -> vector<16x128xf32>
    %c0_88 = arith.constant 0 : index
    %c0_89 = arith.constant 0 : index
    %77 = vector.load %arg5[%c0_88, %c0_89] : memref<1x128xf32, #tpu.memory_space<vmem>>, vector<1x128xf32>
    %78 = vector.broadcast %77 : vector<1x128xf32> to vector<16x128xf32>
    %79 = arith.addf %76, %78 : vector<16x128xf32>
    %80 = arith.addf %79, %9 : vector<16x128xf32>
    %c0_90 = arith.constant 0 : index
    %c0_91 = arith.constant 0 : index
    %c0_92 = arith.constant 0 : index
    %81 = vector.load %arg6[%c0_90, %c0_91, %c0_92] : memref<1x16x128xf32, #tpu.memory_space<vmem>>, vector<1x16x128xf32>
    %82 = vector.shape_cast %81 : vector<1x16x128xf32> to vector<16x128xf32>
    %83 = vector.shape_cast %80 : vector<16x128xf32> to vector<1x16x128xf32>
    tpu.vector_store %arg6[%c0_90, %c0_91, %c0_92], %83 {strides = array<i32>} : memref<1x16x128xf32, #tpu.memory_space<vmem>>, vector<1x16x128xf32>,
    return
  }
  func.func @transform_0(%arg0: i32) -> (i32, i32, i32) {
    %c0_i32 = arith.constant 0 : i32
    %c0_i32_0 = arith.constant 0 : i32
    %c0_i32_1 = arith.constant 0 : i32
    return %arg0, %c0_i32, %c0_i32_0 : i32, i32, i32
  }
  func.func @transform_1(%arg0: i32) -> (i32, i32) {
    %c0_i32 = arith.constant 0 : i32
    %c0_i32_0 = arith.constant 0 : i32
    %c0_i32_1 = arith.constant 0 : i32
    return %c0_i32, %c0_i32_0 : i32, i32
  }
  func.func @transform_2(%arg0: i32) -> (i32, i32) {
    %c0_i32 = arith.constant 0 : i32
    %c0_i32_0 = arith.constant 0 : i32
    %c0_i32_1 = arith.constant 0 : i32
    return %c0_i32, %c0_i32_0 : i32, i32
  }
  func.func @transform_3(%arg0: i32) -> (i32, i32) {
    %c0_i32 = arith.constant 0 : i32
    %c0_i32_0 = arith.constant 0 : i32
    %c0_i32_1 = arith.constant 0 : i32
    return %c0_i32, %c0_i32_0 : i32, i32
  }
  func.func @transform_4(%arg0: i32) -> (i32, i32) {
    %c0_i32 = arith.constant 0 : i32
    %c0_i32_0 = arith.constant 0 : i32
    %c0_i32_1 = arith.constant 0 : i32
    return %c0_i32, %c0_i32_0 : i32, i32
  }
  func.func @transform_5(%arg0: i32) -> (i32, i32, i32) {
    %c0_i32 = arith.constant 0 : i32
    %c0_i32_0 = arith.constant 0 : i32
    %c0_i32_1 = arith.constant 0 : i32
    return %arg0, %c0_i32, %c0_i32_0 : i32, i32, i32
  }
}

</mosaic_0001>

<llo_original>
// kernel: tile.13
$region0: #{tile.13}
  #allocation0 [shape = 's32[1]{0}', space=sflag, size = 0x4, scoped, tag = 'scoped memory for tile.13']
  %s0 = inlined_call_operand.vmem [shape: f32[8], index: 0, kind: input, shape index: {}]
  %s1 = inlined_call_operand.vmem [shape: f32[16,8], index: 1, kind: output, shape index: {}]
  // Predicated region
  $region2: #{tile.13} parent=0 // pred_check
    _
  $region3: #{tile.13} parent=0 // pred_check_branch
    %3 = sbr.rel (0) target = $region5
  $region4: #{tile.13} parent=0 // pred_region
    _
  $region5: #{tile.13} parent=0 // pred_fallthru
    _
  %v4 = vld [vmem:[%s0] ss:$0 sm:$0xff]
  %5 = vst [vmem:[%s1] sm:$0xff] %v4
  %s6 = scalar_lea.vmem %s1, 8
  %7 = vst [vmem:[%s6] sm:$0xff] %v4

// kernel: tile.14
$region0: #{tile.14}
  %s0 = inlined_call_operand.vmem [shape: f32[16,8], index: 0, kind: input, shape index: {}]
  %s1 = inlined_call_operand.vmem [shape: f32[1,128], index: 1, kind: output, shape index: {}]
  $region1: #{tile.14} parent=0
    #allocation0 [shape = 'u8[4096]{0}', space=vmem, size = 0x1000, scoped, tag = 'scoped mem for output reshape']
    %v2 = vld [vmem:[%s0] sm:$0x1]
    %vm3 = vcmask 64512
    %4 = vst.msk [vmem:[#allocation0] sm:$0x1] %vm3, %v2
    %s5 = scalar_lea.vmem %s0, 15
    %v6 = vld [vmem:[%s5] sm:$0x1]
    %7 = vrot.lane.b32.xlu0 %v6, 120
    %v8 = vpop.permute.xlu0 %7
    %vm9 = vcmask 1048512
    %10 = vst.msk [vmem:[#allocation0] sm:$0x1] %vm9, %v8
    %s11 = scalar_lea.vmem %s0, 14
    %v12 = vld [vmem:[%s11] sm:$0x1]
    %13 = vrot.lane.b32.xlu0 %v12, 112
    %v14 = vpop.permute.xlu0 %13
    %vm15 = vcmask 982912
    %16 = vst.msk [vmem:[#allocation0] sm:$0x1] %vm15, %v14
    %s17 = scalar_lea.vmem %s0, 13
    %v18 = vld [vmem:[%s17] sm:$0x1]
    %19 = vrot.lane.b32.xlu0 %v18, 104
    %v20 = vpop.permute.xlu0 %19
    %vm21 = vcmask 917312
    %22 = vst.msk [vmem:[#allocation0] sm:$0x1] %vm21, %v20
    %s23 = scalar_lea.vmem %s0, 12
    %v24 = vld [vmem:[%s23] sm:$0x1]
    %25 = vrot.lane.b32.xlu0 %v24, 96
    %v26 = vpop.permute.xlu0 %25
    %vm27 = vcmask 851712
    %28 = vst.msk [vmem:[#allocation0] sm:$0x1] %vm27, %v26
    %s29 = scalar_lea.vmem %s0, 11
    %v30 = vld [vmem:[%s29] sm:$0x1]
    %31 = vrot.lane.b32.xlu0 %v30, 88
    %v32 = vpop.permute.xlu0 %31
    %vm33 = vcmask 786112
    %34 = vst.msk [vmem:[#allocation0] sm:$0x1] %vm33, %v32
    %s35 = scalar_lea.vmem %s0, 10
    %v36 = vld [vmem:[%s35] sm:$0x1]
    %37 = vrot.lane.b32.xlu0 %v36, 80
    %v38 = vpop.permute.xlu0 %37
    %vm39 = vcmask 720512
    %40 = vst.msk [vmem:[#allocation0] sm:$0x1] %vm39, %v38
    %s41 = scalar_lea.vmem %s0, 9
    %v42 = vld [vmem:[%s41] sm:$0x1]
    %43 = vrot.lane.b32.xlu0 %v42, 72
    %v44 = vpop.permute.xlu0 %43
    %vm45 = vcmask 654912
    %46 = vst.msk [vmem:[#allocation0] sm:$0x1] %vm45, %v44
    %s47 = scalar_lea.vmem %s0, 8
    %v48 = vld [vmem:[%s47] sm:$0x1]
    %49 = vrot.lane.b32.xlu0 %v48, 64
    %v50 = vpop.permute.xlu0 %49
    %vm51 = vcmask 589312
    %52 = vst.msk [vmem:[#allocation0] sm:$0x1] %vm51, %v50
    %s53 = scalar_lea.vmem %s0, 7
    %v54 = vld [vmem:[%s53] sm:$0x1]
    %55 = vrot.lane.b32.xlu0 %v54, 56
    %v56 = vpop.permute.xlu0 %55
    %vm57 = vcmask 523712
    %58 = vst.msk [vmem:[#allocation0] sm:$0x1] %vm57, %v56
    %s59 = scalar_lea.vmem %s0, 6
    %v60 = vld [vmem:[%s59] sm:$0x1]
    %61 = vrot.lane.b32.xlu0 %v60, 48
    %v62 = vpop.permute.xlu0 %61
    %vm63 = vcmask 458112
    %64 = vst.msk [vmem:[#allocation0] sm:$0x1] %vm63, %v62
    %s65 = scalar_lea.vmem %s0, 5
    %v66 = vld [vmem:[%s65] sm:$0x1]
    %67 = vrot.lane.b32.xlu0 %v66, 40
    %v68 = vpop.permute.xlu0 %67
    %vm69 = vcmask 392512
    %70 = vst.msk [vmem:[#allocation0] sm:$0x1] %vm69, %v68
    %s71 = scalar_lea.vmem %s0, 4
    %v72 = vld [vmem:[%s71] sm:$0x1]
    %73 = vrot.lane.b32.xlu0 %v72, 32
    %v74 = vpop.permute.xlu0 %73
    %vm75 = vcmask 326912
    %76 = vst.msk [vmem:[#allocation0] sm:$0x1] %vm75, %v74
    %s77 = scalar_lea.vmem %s0, 3
    %v78 = vld [vmem:[%s77] sm:$0x1]
    %79 = vrot.lane.b32.xlu0 %v78, 24
    %v80 = vpop.permute.xlu0 %79
    %vm81 = vcmask 261312
    %82 = vst.msk [vmem:[#allocation0] sm:$0x1] %vm81, %v80
    %s83 = scalar_lea.vmem %s0, 2
    %v84 = vld [vmem:[%s83] sm:$0x1]
    %85 = vrot.lane.b32.xlu0 %v84, 16
    %v86 = vpop.permute.xlu0 %85
    %vm87 = vcmask 195712
    %88 = vst.msk [vmem:[#allocation0] sm:$0x1] %vm87, %v86
    %s89 = scalar_lea.vmem %s0, 1
    %v90 = vld [vmem:[%s89] sm:$0x1]
    %91 = vrot.lane.b32.xlu0 %v90, 8
    %v92 = vpop.permute.xlu0 %91
    %vm93 = vcmask 130112
    %94 = vst.msk [vmem:[#allocation0] sm:$0x1] %vm93, %v92
    %s96 = sshllo.u32 0, 1
    %v98 = vld [vmem:[#allocation0] sm:%s96]
    %s99 = sshllo.u32 0, 1
    %100 = vst [vmem:[%s1] sm:%s99] %v98

// kernel: basic_block_forward.1
$region0: #{basic_block_forward.1}
  #allocation0 [shape = 'u32[]', space=smem, size = 0x4, offset = 0x4, fixed_abs, tag = 'smem constant byte address 0x4 - core index']
  #allocation1 [shape = 'u32[144,128]{1,0:T(1,128)}', space=vmem, size = 0x12000, scoped, tag = 'internal scratch']
  #allocation2 [shape = 'f32[18,144]{1,0:T(8,128)}', space=vmem, size = 0x6000, scoped, tag = 'scratch operand']
  #allocation3 [shape = 'bf16[16,1152]{1,0:T(16,128)(2,1)}', space=vmem, size = 0x9000, scoped, tag = 'scratch operand']
  %s0 = inlined_call_operand.vmem [shape: f32[2,16,128], index: 0, kind: input, shape index: {}]
  %s1 = inlined_call_operand.vmem [shape: bf16[1152,128], index: 1, kind: input, shape index: {}]
  %s2 = inlined_call_operand.vmem [shape: f32[1,128], index: 2, kind: input, shape index: {}]
  %s3 = inlined_call_operand.vmem [shape: bf16[1152,128], index: 3, kind: input, shape index: {}]
  %s4 = inlined_call_operand.vmem [shape: f32[1,128], index: 4, kind: input, shape index: {}]
  %s5 = inlined_call_operand.vmem [shape: f32[2,16,128], index: 5, kind: output, shape index: {}]
  %s6 = sld [smem:[#allocation0]]
  $region53: #{basic_block_forward.1} parent=0
    _
  %s8 = ssub.s32 1, %s6
  %s9 = scalar_select 0, %s8, %s6
  loop: start=0, step=1, limit=4
  $region2: #{basic_block_forward.1} parent=0 // loop_pre_header
    _
  $region3: #{basic_block_forward.1} parent=0 // loop_header
    %s11 = sphi 0, %s15
    %p12 = scmp.ge.s32.totalorder %s11, 4
    %s21 = sphi 0, %s23
    %s24 = sphi 0, %s21
    %s25 = sphi 0, %s24
    %s41 = sphi 0, %s25
    %s45 = sphi 0, %s45
    %s47 = sphi 0, %s45
    %s48 = sphi 0, %s47
    %s62 = sphi 0, %s48
    %s66 = sphi 0, %s66
    %s68 = sphi 0, %s66
    %s69 = sphi 0, %s68
    %s83 = sphi 0, %s69
    %s87 = sphi 0, %s87
    %s89 = sphi 0, %s87
    %s90 = sphi 0, %s89
    %s104 = sphi 0, %s90
    %s108 = sphi 0, %s108
    %s110 = sphi 0, %s108
    %s111 = sphi 0, %s110
    %s125 = sphi 0, %s111
    %s131 = sphi 0, %s133
    %s134 = sphi 0, %s131
    %s135 = sphi 0, %s134
    %s151 = sphi 0, %s135
  $region4: #{basic_block_forward.1} parent=0 // loop_header_branch
    %14 = sbr.rel (%p12) target = $region8
  $region5: #{basic_block_forward.1} parent=0 // loop_body
    %s16 = ssub.s32 %s11, 1
    %s17 = ssub.s32 %s11, 2
    %s18 = sadd.s32 %s11, 1
    %s19 = ssub.s32 %s11, %s18
    %p20 = scmp.eq.s32.totalorder %s19, 0
    %s22 = sadd.s32 %s21, 1
    %s23 = scalar_select %p20, %s21, %s22
    %p26 = pneg %p20
    %p27 = scmp.eq.s32.totalorder %s11, 1
    %p28 = por %p26, %p27
    %p29 = scmp.ne.s32.totalorder %s21, %s24
    %p30 = scmp.eq.s32.totalorder %s11, 0
    %p31 = por %p29, %p30
    %p32 = scmp.ne.s32.totalorder %s21, %s24
    %p33 = scmp.eq.s32.totalorder %s16, 1
    %p34 = por %p32, %p33
    %p35 = scmp.ne.s32.totalorder %s24, %s25
    %p36 = scmp.eq.s32.totalorder %s16, 0
    %p37 = por %p35, %p36
    %p38 = scmp.ne.s32.totalorder %s24, %s25
    %p39 = scmp.eq.s32.totalorder %s17, 1
    %p40 = por %p38, %p39
    %p42 = scmp.ne.s32.totalorder %s25, %s41
    %p43 = scmp.eq.s32.totalorder %s17, 0
    %p44 = por %p42, %p43
    %s46 = sadd.s32 %s45, 1
    %p49 = scmp.eq.s32.totalorder %s11, 1
    %p50 = scmp.ne.s32.totalorder %s45, %s47
    %p51 = scmp.eq.s32.totalorder %s11, 0
    %p52 = por %p50, %p51
    %p53 = scmp.ne.s32.totalorder %s45, %s47
    %p54 = scmp.eq.s32.totalorder %s16, 1
    %p55 = por %p53, %p54
    %p56 = scmp.ne.s32.totalorder %s47, %s48
    %p57 = scmp.eq.s32.totalorder %s16, 0
    %p58 = por %p56, %p57
    %p59 = scmp.ne.s32.totalorder %s47, %s48
    %p60 = scmp.eq.s32.totalorder %s17, 1
    %p61 = por %p59, %p60
    %p63 = scmp.ne.s32.totalorder %s48, %s62
    %p64 = scmp.eq.s32.totalorder %s17, 0
    %p65 = por %p63, %p64
    %s67 = sadd.s32 %s66, 1
    %p70 = scmp.eq.s32.totalorder %s11, 1
    %p71 = scmp.ne.s32.totalorder %s66, %s68
    %p72 = scmp.eq.s32.totalorder %s11, 0
    %p73 = por %p71, %p72
    %p74 = scmp.ne.s32.totalorder %s66, %s68
    %p75 = scmp.eq.s32.totalorder %s16, 1
    %p76 = por %p74, %p75
    %p77 = scmp.ne.s32.totalorder %s68, %s69
    %p78 = scmp.eq.s32.totalorder %s16, 0
    %p79 = por %p77, %p78
    %p80 = scmp.ne.s32.totalorder %s68, %s69
    %p81 = scmp.eq.s32.totalorder %s17, 1
    %p82 = por %p80, %p81
    %p84 = scmp.ne.s32.totalorder %s69, %s83
    %p85 = scmp.eq.s32.totalorder %s17, 0
    %p86 = por %p84, %p85
    %s88 = sadd.s32 %s87, 1
    %p91 = scmp.eq.s32.totalorder %s11, 1
    %p92 = scmp.ne.s32.totalorder %s87, %s89
    %p93 = scmp.eq.s32.totalorder %s11, 0
    %p94 = por %p92, %p93
    %p95 = scmp.ne.s32.totalorder %s87, %s89
    %p96 = scmp.eq.s32.totalorder %s16, 1
    %p97 = por %p95, %p96
    %p98 = scmp.ne.s32.totalorder %s89, %s90
    %p99 = scmp.eq.s32.totalorder %s16, 0
    %p100 = por %p98, %p99
    %p101 = scmp.ne.s32.totalorder %s89, %s90
    %p102 = scmp.eq.s32.totalorder %s17, 1
    %p103 = por %p101, %p102
    %p105 = scmp.ne.s32.totalorder %s90, %s104
    %p106 = scmp.eq.s32.totalorder %s17, 0
    %p107 = por %p105, %p106
    %s109 = sadd.s32 %s108, 1
    %p112 = scmp.eq.s32.totalorder %s11, 1
    %p113 = scmp.ne.s32.totalorder %s108, %s110
    %p114 = scmp.eq.s32.totalorder %s11, 0
    %p115 = por %p113, %p114
    %p116 = scmp.ne.s32.totalorder %s108, %s110
    %p117 = scmp.eq.s32.totalorder %s16, 1
    %p118 = por %p116, %p117
    %p119 = scmp.ne.s32.totalorder %s110, %s111
    %p120 = scmp.eq.s32.totalorder %s16, 0
    %p121 = por %p119, %p120
    %p122 = scmp.ne.s32.totalorder %s110, %s111
    %p123 = scmp.eq.s32.totalorder %s17, 1
    %p124 = por %p122, %p123
    %p126 = scmp.ne.s32.totalorder %s111, %s125
    %p127 = scmp.eq.s32.totalorder %s17, 0
    %p128 = por %p126, %p127
    %s129 = ssub.s32 %s11, %s18
    %p130 = scmp.eq.s32.totalorder %s129, 0
    %s132 = sadd.s32 %s131, 1
    %s133 = scalar_select %p130, %s131, %s132
    %p136 = pneg %p130
    %p137 = scmp.eq.s32.totalorder %s11, 1
    %p138 = por %p136, %p137
    %p139 = scmp.ne.s32.totalorder %s131, %s134
    %p140 = scmp.eq.s32.totalorder %s11, 0
    %p141 = por %p139, %p140
    %p142 = scmp.ne.s32.totalorder %s131, %s134
    %p143 = scmp.eq.s32.totalorder %s16, 1
    %p144 = por %p142, %p143
    %p145 = scmp.ne.s32.totalorder %s134, %s135
    %p146 = scmp.eq.s32.totalorder %s16, 0
    %p147 = por %p145, %p146
    %p148 = scmp.ne.s32.totalorder %s134, %s135
    %p149 = scmp.eq.s32.totalorder %s17, 1
    %p150 = por %p148, %p149
    %p152 = scmp.ne.s32.totalorder %s135, %s151
    %p153 = scmp.eq.s32.totalorder %s17, 0
    %p154 = por %p152, %p153
    %p155 = scmp.le.s32.totalorder 1, %s11
    %p156 = scmp.lt.s32.totalorder %s11, 3
    %p157 = pnand %p155, %p156
    %p158 = pneg %p157
    // Predicated region
    $region9: #{basic_block_forward.1} parent=5 // pred_check
      _
    $region10: #{basic_block_forward.1} parent=5 // pred_check_branch
      %160 = sbr.rel (%p157) target = $region12
    $region11: #{basic_block_forward.1} parent=5 // pred_region
      %s161 = ssub.s32 %s11, 1
      // Predicated region
      $region13: #{basic_block_forward.1} parent=11 // pred_check
        %p162 = pneg %p58
      $region14: #{basic_block_forward.1} parent=11 // pred_check_branch
        %164 = sbr.rel (%p162) target = $region16
      $region15: #{basic_block_forward.1} parent=11 // pred_region
        _
      $region16: #{basic_block_forward.1} parent=11 // pred_fallthru
        _
      // Predicated region
      $region17: #{basic_block_forward.1} parent=11 // pred_check
        %p165 = pneg %p79
      $region18: #{basic_block_forward.1} parent=11 // pred_check_branch
        %167 = sbr.rel (%p165) target = $region20
      $region19: #{basic_block_forward.1} parent=11 // pred_region
        _
      $region20: #{basic_block_forward.1} parent=11 // pred_fallthru
        _
      // Predicated region
      $region21: #{basic_block_forward.1} parent=11 // pred_check
        %p168 = pneg %p100
      $region22: #{basic_block_forward.1} parent=11 // pred_check_branch
        %170 = sbr.rel (%p168) target = $region24
      $region23: #{basic_block_forward.1} parent=11 // pred_region
        _
      $region24: #{basic_block_forward.1} parent=11 // pred_fallthru
        _
      // Predicated region
      $region25: #{basic_block_forward.1} parent=11 // pred_check
        %p171 = pneg %p121
      $region26: #{basic_block_forward.1} parent=11 // pred_check_branch
        %173 = sbr.rel (%p171) target = $region28
      $region27: #{basic_block_forward.1} parent=11 // pred_region
        _
      $region28: #{basic_block_forward.1} parent=11 // pred_fallthru
        _
    $region12: #{basic_block_forward.1} parent=5 // pred_fallthru
      _
    %p174 = scmp.lt.s32.totalorder %s11, 2
    // Predicated region
    $region29: #{basic_block_forward.1} parent=5 // pred_check
      %p175 = pneg %p174
    $region30: #{basic_block_forward.1} parent=5 // pred_check_branch
      %177 = sbr.rel (%p175) target = $region32
    $region31: #{basic_block_forward.1} parent=5 // pred_region
      // Predicated region
      $region33: #{basic_block_forward.1} parent=31 // pred_check
        %p178 = pneg %p31
      $region34: #{basic_block_forward.1} parent=31 // pred_check_branch
        %180 = sbr.rel (%p178) target = $region36
      $region35: #{basic_block_forward.1} parent=31 // pred_region
        %p181 = scmp.lt.s32.totalorder %s11, 1
        %s182 = scalar_select %p181, %s11, 1
        %s183 = smul.addr %s182, 2
        %s184 = smul.addr %s183, 8
        %s185 = scalar_lea.vmem %s0, %s184
      $region36: #{basic_block_forward.1} parent=31 // pred_fallthru
        _
    $region32: #{basic_block_forward.1} parent=5 // pred_fallthru
      _
    %p186 = scmp.le.s32.totalorder 1, %s11
    %p187 = scmp.lt.s32.totalorder %s11, 3
    %p188 = pnand %p186, %p187
    %p189 = pneg %p188
    // Predicated region
    $region37: #{basic_block_forward.1} parent=5 // pred_check
      _
    $region38: #{basic_block_forward.1} parent=5 // pred_check_branch
      %191 = sbr.rel (%p188) target = $region40
    $region39: #{basic_block_forward.1} parent=5 // pred_region
      %s192 = ssub.s32 %s11, 1
      %p193 = scmp.lt.s32.totalorder %s16, 1
      %s194 = scalar_select %p193, %s16, 1
      %s195 = smul.addr %s194, 2
      %s196 = smul.addr %s195, 8
      %s197 = scalar_lea.vmem %s0, %s196
      %p198 = pneg %p37
      %p199 = pneg %p34
      %p200 = pneg %p58
      %p201 = pneg %p55
      %p202 = pneg %p79
      %p203 = pneg %p76
      %p204 = pneg %p100
      %p205 = pneg %p97
      %p206 = pneg %p121
      %p207 = pneg %p118
      %p208 = pneg %p147
      %p209 = pneg %p144
      %p210 = scmp.lt.s32.totalorder %s16, 1
      %s211 = scalar_select %p210, %s16, 1
      %s212 = smul.addr %s211, 2
      %s213 = smul.addr %s212, 8
      %s214 = scalar_lea.vmem %s5, %s213
      %p215 = scmp.lt.s32.totalorder %s16, 1
      %s216 = scalar_select %p215, %s16, 1
      %s217 = smul.addr %s216, 2
      %s218 = smul.addr %s217, 8
      %s219 = scalar_lea.vmem %s0, %s218
      %p220 = scmp.lt.s32.totalorder %s16, 1
      %s221 = scalar_select %p220, %s16, 1
      %s222 = smul.addr %s221, 2
      %s223 = smul.addr %s222, 8
      %s224 = scalar_lea.vmem %s5, %s223
      %v226 = vlaneseq
      %vm227 = vcmp.ge.s32.totalorder %v226, 0
      %vm228 = vcmp.lt.s32.totalorder %v226, 144
      %vm229 = vmand %vm227, %vm228
      %230 = vst.msk [vmem:[#allocation2] ss:$8 sm:$0x3] %vm229, 0.0
      %231 = vst.msk [vmem:[#allocation2] ss:$8 sm:$0x0] %vm229, 0.0
      %s232 = scalar_lea.vmem [#allocation2], 33
      %233 = vst.msk [vmem:[%s232] ss:$8 sm:$0x3] %vm229, 0.0
      %234 = vst.msk [vmem:[%s232] ss:$8 sm:$0x0] %vm229, 0.0
      %vm235 = vcmask 64513
      %236 = vst.msk [vmem:[#allocation2] sm:$0xfe] %vm235, 0.0
      %vm237 = vcmask 64512
      %238 = vst.msk [vmem:[#allocation2 + $0x10] sm:$0xff] %vm237, 0.0
      %vm239 = vcmask 57344
      %240 = vst.msk [vmem:[#allocation2 + $0x20] sm:$0x1] %vm239, 0.0
      %vm241 = vcmask 130113
      %242 = vst.msk [vmem:[#allocation2 + $0x8] sm:$0xfe] %vm241, 0.0
      %vm243 = vcmask 130112
      %244 = vst.msk [vmem:[#allocation2 + $0x18] sm:$0xff] %vm243, 0.0
      %vm245 = vcmask 122944
      %246 = vst.msk [vmem:[#allocation2 + $0x28] sm:$0x1] %vm245, 0.0
      %v247 = vld [vmem:[%s219] sm:$0xff]
      %v248 = vld [vmem:[%s219 + $0x8] sm:$0xff]
      %vm251 = vcmask 1040384
      %v252 = vrot.slane %v247, 7
      %v253 = vrot.slane %v248, 7
      %v254 = vsel %vm251, %v252, %v253
      %255 = vrot.lane.b32.xlu0 %v252, 8
      %v256 = vpop.permute.xlu0 %255
      %257 = vrot.lane.b32.xlu0 %v254, 8
      %v258 = vpop.permute.xlu0 %257
      %259 = vrot.lane.b32.xlu0 %v253, 8
      %v260 = vpop.permute.xlu0 %259
      %vm264 = vcmask 1047617
      %265 = vst.msk [vmem:[#allocation2] sm:$0xfe] %vm264, %v256
      %266 = vst.msk [vmem:[#allocation2 + $0x8] sm:$0xfe] %vm235, %v256
      %vm267 = vcmask 1047616
      %268 = vst.msk [vmem:[#allocation2 + $0x10] sm:$0xff] %vm267, %v258
      %269 = vst.msk [vmem:[#allocation2 + $0x18] sm:$0xff] %vm237, %v258
      %vm270 = vcmask 1040448
      %271 = vst.msk [vmem:[#allocation2 + $0x20] sm:$0x1] %vm270, %v260
      %272 = vst.msk [vmem:[#allocation2 + $0x28] sm:$0x1] %vm239, %v260
      %v273 = vld [vmem:[#allocation2] sm:$0xff]
      %v274 = vld [vmem:[#allocation2 + $0x10] sm:$0xff]
      %v275 = vpack.c.bf16 %v274, %v273
      %276 = vst [vmem:[#allocation3] sm:$0xff] %v275
      %v277 = vld [vmem:[#allocation2] sm:$0xff]
      %v278 = vld [vmem:[#allocation2 + $0x8] sm:$0xff]
      %v279 = vld [vmem:[#allocation2 + $0x10] sm:$0xff]
      %v280 = vld [vmem:[#allocation2 + $0x18] sm:$0xff]
      %v281 = vpack.c.bf16 %v279, %v277
      %v282 = vpack.c.bf16 %v280, %v278
      %285 = vrot.lane.b32.xlu0 %v281, 120
      %v286 = vpop.permute.xlu0 %285
      %287 = vrot.lane.b32.xlu0 %v282, 120
      %v288 = vpop.permute.xlu0 %287
      %vm289 = vcmask 982016
      %v290 = vsel %vm289, %v286, %v288
      %292 = vst [vmem:[#allocation3 + $0x8] sm:$0xff] %v290
      %v293 = vld [vmem:[#allocation2] sm:$0xff]
      %v294 = vld [vmem:[#allocation2 + $0x8] sm:$0xff]
      %v295 = vld [vmem:[#allocation2 + $0x10] sm:$0xff]
      %v296 = vld [vmem:[#allocation2 + $0x18] sm:$0xff]
      %v297 = vpack.c.bf16 %v295, %v293
      %v298 = vpack.c.bf16 %v296, %v294
      %301 = vrot.lane.b32.xlu0 %v297, 112
      %v302 = vpop.permute.xlu0 %301
      %303 = vrot.lane.b32.xlu0 %v298, 112
      %v304 = vpop.permute.xlu0 %303
      %vm305 = vcmask 916480
      %v306 = vsel %vm305, %v302, %v304
      %308 = vst [vmem:[#allocation3 + $0x10] sm:$0xff] %v306
      %v309 = vld [vmem:[#allocation2] sm:$0xfe]
      %v310 = vld [vmem:[#allocation2 + $0x10] sm:$0xff]
      %v311 = vld [vmem:[#allocation2 + $0x20] sm:$0x1]
      %v312 = vpack.c.bf16 %v310, %v309
      %v313 = vpack.c.bf16 %v311, %v311
      %vm314 = vsmask.f32 7424
      %v316 = vshrl.u32 %v312, 16
      %v318 = vshll.u32 %v312, 16
      %v320 = vrot.slane %v318, 1
      %v321 = vor.u32 %v316, %v320
      %v323 = vshll.u32 %v313, 16
      %v325 = vrot.slane %v323, 1
      %v326 = vsel %vm314, %v321, %v325
      %328 = vst [vmem:[#allocation3 + $0x18] sm:$0xff] %v326
      %v329 = vld [vmem:[#allocation2] sm:$0xfe]
      %v330 = vld [vmem:[#allocation2 + $0x8] sm:$0xfe]
      %v331 = vld [vmem:[#allocation2 + $0x10] sm:$0xff]
      %v332 = vld [vmem:[#allocation2 + $0x18] sm:$0xff]
      %v333 = vld [vmem:[#allocation2 + $0x20] sm:$0x1]
      %v334 = vld [vmem:[#allocation2 + $0x28] sm:$0x1]
      %v335 = vpack.c.bf16 %v331, %v329
      %v336 = vpack.c.bf16 %v332, %v330
      %v337 = vpack.c.bf16 %v333, %v333
      %v338 = vpack.c.bf16 %v334, %v334
      %v340 = vshrl.u32 %v335, 16
      %v342 = vshll.u32 %v335, 16
      %v344 = vrot.slane %v342, 1
      %v345 = vor.u32 %v340, %v344
      %v347 = vshll.u32 %v337, 16
      %v349 = vrot.slane %v347, 1
      %v350 = vsel %vm314, %v345, %v349
      %v352 = vshrl.u32 %v336, 16
      %v354 = vshll.u32 %v336, 16
      %v356 = vrot.slane %v354, 1
      %v357 = vor.u32 %v352, %v356
      %v359 = vshll.u32 %v338, 16
      %v361 = vrot.slane %v359, 1
      %v362 = vsel %vm314, %v357, %v361
      %363 = vrot.lane.b32.xlu0 %v350, 120
      %v364 = vpop.permute.xlu0 %363
      %365 = vrot.lane.b32.xlu0 %v362, 120
      %v366 = vpop.permute.xlu0 %365
      %v367 = vsel %vm289, %v364, %v366
      %369 = vst [vmem:[#allocation3 + $0x20] sm:$0xff] %v367
      %v370 = vld [vmem:[#allocation2] sm:$0xfe]
      %v371 = vld [vmem:[#allocation2 + $0x8] sm:$0xfe]
      %v372 = vld [vmem:[#allocation2 + $0x10] sm:$0xff]
      %v373 = vld [vmem:[#allocation2 + $0x18] sm:$0xff]
      %v374 = vld [vmem:[#allocation2 + $0x20] sm:$0x1]
      %v375 = vld [vmem:[#allocation2 + $0x28] sm:$0x1]
      %v376 = vpack.c.bf16 %v372, %v370
      %v377 = vpack.c.bf16 %v373, %v371
      %v378 = vpack.c.bf16 %v374, %v374
      %v379 = vpack.c.bf16 %v375, %v375
      %v381 = vshrl.u32 %v376, 16
      %v383 = vshll.u32 %v376, 16
      %v385 = vrot.slane %v383, 1
      %v386 = vor.u32 %v381, %v385
      %v388 = vshll.u32 %v378, 16
      %v390 = vrot.slane %v388, 1
      %v391 = vsel %vm314, %v386, %v390
      %v393 = vshrl.u32 %v377, 16
      %v395 = vshll.u32 %v377, 16
      %v397 = vrot.slane %v395, 1
      %v398 = vor.u32 %v393, %v397
      %v400 = vshll.u32 %v379, 16
      %v402 = vrot.slane %v400, 1
      %v403 = vsel %vm314, %v398, %v402
      %404 = vrot.lane.b32.xlu0 %v391, 112
      %v405 = vpop.permute.xlu0 %404
      %406 = vrot.lane.b32.xlu0 %v403, 112
      %v407 = vpop.permute.xlu0 %406
      %v408 = vsel %vm305, %v405, %v407
      %410 = vst [vmem:[#allocation3 + $0x28] sm:$0xff] %v408
      %v411 = vld [vmem:[#allocation2] sm:$0xfc]
      %v412 = vld [vmem:[#allocation2 + $0x10] sm:$0xff]
      %v413 = vld [vmem:[#allocation2 + $0x20] sm:$0x3]
      %v414 = vpack.c.bf16 %v412, %v411
      %v415 = vpack.c.bf16 %v413, %v413
      %vm418 = vcmask 1046528
      %v419 = vrot.slane %v414, 1
      %v420 = vrot.slane %v415, 1
      %v421 = vsel %vm418, %v419, %v420
      %423 = vst [vmem:[#allocation3 + $0x30] sm:$0xff] %v421
      %v424 = vld [vmem:[#allocation2] sm:$0xfc]
      %v425 = vld [vmem:[#allocation2 + $0x8] sm:$0xfc]
      %v426 = vld [vmem:[#allocation2 + $0x10] sm:$0xff]
      %v427 = vld [vmem:[#allocation2 + $0x18] sm:$0xff]
      %v428 = vld [vmem:[#allocation2 + $0x20] sm:$0x3]
      %v429 = vld [vmem:[#allocation2 + $0x28] sm:$0x3]
      %v430 = vpack.c.bf16 %v426, %v424
      %v431 = vpack.c.bf16 %v427, %v425
      %v432 = vpack.c.bf16 %v428, %v428
      %v433 = vpack.c.bf16 %v429, %v429
      %v438 = vrot.slane %v430, 1
      %v439 = vrot.slane %v432, 1
      %v440 = vsel %vm418, %v438, %v439
      %v441 = vrot.slane %v431, 1
      %v442 = vrot.slane %v433, 1
      %v443 = vsel %vm418, %v441, %v442
      %444 = vrot.lane.b32.xlu0 %v440, 120
      %v445 = vpop.permute.xlu0 %444
      %446 = vrot.lane.b32.xlu0 %v443, 120
      %v447 = vpop.permute.xlu0 %446
      %v448 = vsel %vm289, %v445, %v447
      %450 = vst [vmem:[#allocation3 + $0x38] sm:$0xff] %v448
      %v451 = vld [vmem:[#allocation2] sm:$0xfc]
      %v452 = vld [vmem:[#allocation2 + $0x8] sm:$0xfc]
      %v453 = vld [vmem:[#allocation2 + $0x10] sm:$0xff]
      %v454 = vld [vmem:[#allocation2 + $0x18] sm:$0xff]
      %v455 = vld [vmem:[#allocation2 + $0x20] sm:$0x3]
      %v456 = vld [vmem:[#allocation2 + $0x28] sm:$0x3]
      %v457 = vpack.c.bf16 %v453, %v451
      %v458 = vpack.c.bf16 %v454, %v452
      %v459 = vpack.c.bf16 %v455, %v455
      %v460 = vpack.c.bf16 %v456, %v456
      %v465 = vrot.slane %v457, 1
      %v466 = vrot.slane %v459, 1
      %v467 = vsel %vm418, %v465, %v466
      %v468 = vrot.slane %v458, 1
      %v469 = vrot.slane %v460, 1
      %v470 = vsel %vm418, %v468, %v469
      %471 = vrot.lane.b32.xlu0 %v467, 112
      %v472 = vpop.permute.xlu0 %471
      %473 = vrot.lane.b32.xlu0 %v470, 112
      %v474 = vpop.permute.xlu0 %473
      %v475 = vsel %vm305, %v472, %v474
      %477 = vst [vmem:[#allocation3 + $0x40] sm:$0xff] %v475
      %v478 = vld [vmem:[#allocation3] sm:$0xff]
      %v479 = vld [vmem:[#allocation3 + $0x8] sm:$0xff]
      %v480 = vld [vmem:[#allocation3 + $0x10] sm:$0xff]
      %v481 = vld [vmem:[#allocation3 + $0x18] sm:$0xff]
      %v482 = vld [vmem:[#allocation3 + $0x20] sm:$0xff]
      %v483 = vld [vmem:[#allocation3 + $0x28] sm:$0xff]
      %v484 = vld [vmem:[#allocation3 + $0x30] sm:$0xff]
      %v485 = vld [vmem:[#allocation3 + $0x38] sm:$0xff]
      %v486 = vld [vmem:[#allocation3 + $0x40] sm:$0xff]
      %v487 = vld [vmem:[%s1] sm:$0xf]
      %v488 = vld [vmem:[%s1 + $0x4] sm:$0xf]
      %v489 = vld [vmem:[%s1 + $0x8] sm:$0xf]
      %v490 = vld [vmem:[%s1 + $0xc] sm:$0xf]
      %v491 = vld [vmem:[%s1 + $0x10] sm:$0xf]
      %v492 = vld [vmem:[%s1 + $0x14] sm:$0xf]
      %v493 = vld [vmem:[%s1 + $0x18] sm:$0xf]
      %v494 = vld [vmem:[%s1 + $0x1c] sm:$0xf]
      %v495 = vld [vmem:[%s1 + $0x20] sm:$0xf]
      %v496 = vld [vmem:[%s1 + $0x24] sm:$0xf]
      %v497 = vld [vmem:[%s1 + $0x28] sm:$0xf]
      %v498 = vld [vmem:[%s1 + $0x2c] sm:$0xf]
      %v499 = vld [vmem:[%s1 + $0x30] sm:$0xf]
      %v500 = vld [vmem:[%s1 + $0x34] sm:$0xf]
      %v501 = vld [vmem:[%s1 + $0x38] sm:$0xf]
      %v502 = vld [vmem:[%s1 + $0x3c] sm:$0xf]
      %v503 = vld [vmem:[%s1 + $0x40] sm:$0xf]
      %v504 = vld [vmem:[%s1 + $0x44] sm:$0xf]
      %v505 = vld [vmem:[%s1 + $0x48] sm:$0xf]
      %v506 = vld [vmem:[%s1 + $0x4c] sm:$0xf]
      %v507 = vld [vmem:[%s1 + $0x50] sm:$0xf]
      %v508 = vld [vmem:[%s1 + $0x54] sm:$0xf]
      %v509 = vld [vmem:[%s1 + $0x58] sm:$0xf]
      %v510 = vld [vmem:[%s1 + $0x5c] sm:$0xf]
      %v511 = vld [vmem:[%s1 + $0x60] sm:$0xf]
      %v512 = vld [vmem:[%s1 + $0x64] sm:$0xf]
      %v513 = vld [vmem:[%s1 + $0x68] sm:$0xf]
      %v514 = vld [vmem:[%s1 + $0x6c] sm:$0xf]
      %v515 = vld [vmem:[%s1 + $0x70] sm:$0xf]
      %v516 = vld [vmem:[%s1 + $0x74] sm:$0xf]
      %v517 = vld [vmem:[%s1 + $0x78] sm:$0xf]
      %v518 = vld [vmem:[%s1 + $0x7c] sm:$0xf]
      %v519 = vld [vmem:[%s1 + $0x80] sm:$0xf]
      %v520 = vld [vmem:[%s1 + $0x84] sm:$0xf]
      %v521 = vld [vmem:[%s1 + $0x88] sm:$0xf]
      %v522 = vld [vmem:[%s1 + $0x8c] sm:$0xf]
      %v523 = vld [vmem:[%s1 + $0x90] sm:$0xf]
      %v524 = vld [vmem:[%s1 + $0x94] sm:$0xf]
      %v525 = vld [vmem:[%s1 + $0x98] sm:$0xf]
      %v526 = vld [vmem:[%s1 + $0x9c] sm:$0xf]
      %v527 = vld [vmem:[%s1 + $0xa0] sm:$0xf]
      %v528 = vld [vmem:[%s1 + $0xa4] sm:$0xf]
      %v529 = vld [vmem:[%s1 + $0xa8] sm:$0xf]
      %v530 = vld [vmem:[%s1 + $0xac] sm:$0xf]
      %v531 = vld [vmem:[%s1 + $0xb0] sm:$0xf]
      %v532 = vld [vmem:[%s1 + $0xb4] sm:$0xf]
      %v533 = vld [vmem:[%s1 + $0xb8] sm:$0xf]
      %v534 = vld [vmem:[%s1 + $0xbc] sm:$0xf]
      %v535 = vld [vmem:[%s1 + $0xc0] sm:$0xf]
      %v536 = vld [vmem:[%s1 + $0xc4] sm:$0xf]
      %v537 = vld [vmem:[%s1 + $0xc8] sm:$0xf]
      %v538 = vld [vmem:[%s1 + $0xcc] sm:$0xf]
      %v539 = vld [vmem:[%s1 + $0xd0] sm:$0xf]
      %v540 = vld [vmem:[%s1 + $0xd4] sm:$0xf]
      %v541 = vld [vmem:[%s1 + $0xd8] sm:$0xf]
      %v542 = vld [vmem:[%s1 + $0xdc] sm:$0xf]
      %v543 = vld [vmem:[%s1 + $0xe0] sm:$0xf]
      %v544 = vld [vmem:[%s1 + $0xe4] sm:$0xf]
      %v545 = vld [vmem:[%s1 + $0xe8] sm:$0xf]
      %v546 = vld [vmem:[%s1 + $0xec] sm:$0xf]
      %v547 = vld [vmem:[%s1 + $0xf0] sm:$0xf]
      %v548 = vld [vmem:[%s1 + $0xf4] sm:$0xf]
      %v549 = vld [vmem:[%s1 + $0xf8] sm:$0xf]
      %v550 = vld [vmem:[%s1 + $0xfc] sm:$0xf]
      %v551 = vld [vmem:[%s1 + $0x100] sm:$0xf]
      %v552 = vld [vmem:[%s1 + $0x104] sm:$0xf]
      %v553 = vld [vmem:[%s1 + $0x108] sm:$0xf]
      %v554 = vld [vmem:[%s1 + $0x10c] sm:$0xf]
      %v555 = vld [vmem:[%s1 + $0x110] sm:$0xf]
      %v556 = vld [vmem:[%s1 + $0x114] sm:$0xf]
      %v557 = vld [vmem:[%s1 + $0x118] sm:$0xf]
      %v558 = vld [vmem:[%s1 + $0x11c] sm:$0xf]
      %v559 = vld [vmem:[%s1 + $0x120] sm:$0xf]
      %v560 = vld [vmem:[%s1 + $0x124] sm:$0xf]
      %v561 = vld [vmem:[%s1 + $0x128] sm:$0xf]
      %v562 = vld [vmem:[%s1 + $0x12c] sm:$0xf]
      %v563 = vld [vmem:[%s1 + $0x130] sm:$0xf]
      %v564 = vld [vmem:[%s1 + $0x134] sm:$0xf]
      %v565 = vld [vmem:[%s1 + $0x138] sm:$0xf]
      %v566 = vld [vmem:[%s1 + $0x13c] sm:$0xf]
      %v567 = vld [vmem:[%s1 + $0x140] sm:$0xf]
      %v568 = vld [vmem:[%s1 + $0x144] sm:$0xf]
      %v569 = vld [vmem:[%s1 + $0x148] sm:$0xf]
      %v570 = vld [vmem:[%s1 + $0x14c] sm:$0xf]
      %v571 = vld [vmem:[%s1 + $0x150] sm:$0xf]
      %v572 = vld [vmem:[%s1 + $0x154] sm:$0xf]
      %v573 = vld [vmem:[%s1 + $0x158] sm:$0xf]
      %v574 = vld [vmem:[%s1 + $0x15c] sm:$0xf]
      %v575 = vld [vmem:[%s1 + $0x160] sm:$0xf]
      %v576 = vld [vmem:[%s1 + $0x164] sm:$0xf]
      %v577 = vld [vmem:[%s1 + $0x168] sm:$0xf]
      %v578 = vld [vmem:[%s1 + $0x16c] sm:$0xf]
      %v579 = vld [vmem:[%s1 + $0x170] sm:$0xf]
      %v580 = vld [vmem:[%s1 + $0x174] sm:$0xf]
      %v581 = vld [vmem:[%s1 + $0x178] sm:$0xf]
      %v582 = vld [vmem:[%s1 + $0x17c] sm:$0xf]
      %v583 = vld [vmem:[%s1 + $0x180] sm:$0xf]
      %v584 = vld [vmem:[%s1 + $0x184] sm:$0xf]
      %v585 = vld [vmem:[%s1 + $0x188] sm:$0xf]
      %v586 = vld [vmem:[%s1 + $0x18c] sm:$0xf]
      %v587 = vld [vmem:[%s1 + $0x190] sm:$0xf]
      %v588 = vld [vmem:[%s1 + $0x194] sm:$0xf]
      %v589 = vld [vmem:[%s1 + $0x198] sm:$0xf]
      %v590 = vld [vmem:[%s1 + $0x19c] sm:$0xf]
      %v591 = vld [vmem:[%s1 + $0x1a0] sm:$0xf]
      %v592 = vld [vmem:[%s1 + $0x1a4] sm:$0xf]
      %v593 = vld [vmem:[%s1 + $0x1a8] sm:$0xf]
      %v594 = vld [vmem:[%s1 + $0x1ac] sm:$0xf]
      %v595 = vld [vmem:[%s1 + $0x1b0] sm:$0xf]
      %v596 = vld [vmem:[%s1 + $0x1b4] sm:$0xf]
      %v597 = vld [vmem:[%s1 + $0x1b8] sm:$0xf]
      %v598 = vld [vmem:[%s1 + $0x1bc] sm:$0xf]
      %v599 = vld [vmem:[%s1 + $0x1c0] sm:$0xf]
      %v600 = vld [vmem:[%s1 + $0x1c4] sm:$0xf]
      %v601 = vld [vmem:[%s1 + $0x1c8] sm:$0xf]
      %v602 = vld [vmem:[%s1 + $0x1cc] sm:$0xf]
      %v603 = vld [vmem:[%s1 + $0x1d0] sm:$0xf]
      %v604 = vld [vmem:[%s1 + $0x1d4] sm:$0xf]
      %v605 = vld [vmem:[%s1 + $0x1d8] sm:$0xf]
      %v606 = vld [vmem:[%s1 + $0x1dc] sm:$0xf]
      %v607 = vld [vmem:[%s1 + $0x1e0] sm:$0xf]
      %v608 = vld [vmem:[%s1 + $0x1e4] sm:$0xf]
      %v609 = vld [vmem:[%s1 + $0x1e8] sm:$0xf]
      %v610 = vld [vmem:[%s1 + $0x1ec] sm:$0xf]
      %v611 = vld [vmem:[%s1 + $0x1f0] sm:$0xf]
      %v612 = vld [vmem:[%s1 + $0x1f4] sm:$0xf]
      %v613 = vld [vmem:[%s1 + $0x1f8] sm:$0xf]
      %v614 = vld [vmem:[%s1 + $0x1fc] sm:$0xf]
      %v615 = vld [vmem:[%s1 + $0x200] sm:$0xf]
      %v616 = vld [vmem:[%s1 + $0x204] sm:$0xf]
      %v617 = vld [vmem:[%s1 + $0x208] sm:$0xf]
      %v618 = vld [vmem:[%s1 + $0x20c] sm:$0xf]
      %v619 = vld [vmem:[%s1 + $0x210] sm:$0xf]
      %v620 = vld [vmem:[%s1 + $0x214] sm:$0xf]
      %v621 = vld [vmem:[%s1 + $0x218] sm:$0xf]
      %v622 = vld [vmem:[%s1 + $0x21c] sm:$0xf]
      %v623 = vld [vmem:[%s1 + $0x220] sm:$0xf]
      %v624 = vld [vmem:[%s1 + $0x224] sm:$0xf]
      %v625 = vld [vmem:[%s1 + $0x228] sm:$0xf]
      %v626 = vld [vmem:[%s1 + $0x22c] sm:$0xf]
      %v627 = vld [vmem:[%s1 + $0x230] sm:$0xf]
      %v628 = vld [vmem:[%s1 + $0x234] sm:$0xf]
      %v629 = vld [vmem:[%s1 + $0x238] sm:$0xf]
      %v630 = vld [vmem:[%s1 + $0x23c] sm:$0xf]
      %v631 = vld [vmem:[%s2] sm:$0x1]
      %v633 = vlaneseq
      %v634 = vshrl.u32 %v633, 7
      %v635 = vsub.s32 0, %v634
      %v636 = vrot.slane %v631, %v635
      %v782 = vunpack.c.l.b16 %v487
      %v783 = vunpack.c.l.b16 %v488
      %v784 = vunpack.c.l.b16 %v489
      %v785 = vunpack.c.l.b16 %v490
      %v786 = vunpack.c.l.b16 %v491
      %v787 = vunpack.c.l.b16 %v492
      %v788 = vunpack.c.l.b16 %v493
      %v789 = vunpack.c.l.b16 %v494
      %v790 = vunpack.c.l.b16 %v495
      %v791 = vunpack.c.l.b16 %v496
      %v792 = vunpack.c.l.b16 %v497
      %v793 = vunpack.c.l.b16 %v498
      %v794 = vunpack.c.l.b16 %v499
      %v795 = vunpack.c.l.b16 %v500
      %v796 = vunpack.c.l.b16 %v501
      %v797 = vunpack.c.l.b16 %v502
      %v798 = vunpack.c.l.b16 %v503
      %v799 = vunpack.c.l.b16 %v504
      %v800 = vunpack.c.l.b16 %v505
      %v801 = vunpack.c.l.b16 %v506
      %v802 = vunpack.c.l.b16 %v507
      %v803 = vunpack.c.l.b16 %v508
      %v804 = vunpack.c.l.b16 %v509
      %v805 = vunpack.c.l.b16 %v510
      %v806 = vunpack.c.l.b16 %v511
      %v807 = vunpack.c.l.b16 %v512
      %v808 = vunpack.c.l.b16 %v513
      %v809 = vunpack.c.l.b16 %v514
      %v810 = vunpack.c.l.b16 %v515
      %v811 = vunpack.c.l.b16 %v516
      %v812 = vunpack.c.l.b16 %v517
      %v813 = vunpack.c.l.b16 %v518
      %v814 = vunpack.c.l.b16 %v519
      %v815 = vunpack.c.l.b16 %v520
      %v816 = vunpack.c.l.b16 %v521
      %v817 = vunpack.c.l.b16 %v522
      %v818 = vunpack.c.l.b16 %v523
      %v819 = vunpack.c.l.b16 %v524
      %v820 = vunpack.c.l.b16 %v525
      %v821 = vunpack.c.l.b16 %v526
      %v822 = vunpack.c.l.b16 %v527
      %v823 = vunpack.c.l.b16 %v528
      %v824 = vunpack.c.l.b16 %v529
      %v825 = vunpack.c.l.b16 %v530
      %v826 = vunpack.c.l.b16 %v531
      %v827 = vunpack.c.l.b16 %v532
      %v828 = vunpack.c.l.b16 %v533
      %v829 = vunpack.c.l.b16 %v534
      %v830 = vunpack.c.l.b16 %v535
      %v831 = vunpack.c.l.b16 %v536
      %v832 = vunpack.c.l.b16 %v537
      %v833 = vunpack.c.l.b16 %v538
      %v834 = vunpack.c.l.b16 %v539
      %v835 = vunpack.c.l.b16 %v540
      %v836 = vunpack.c.l.b16 %v541
      %v837 = vunpack.c.l.b16 %v542
      %v838 = vunpack.c.l.b16 %v543
      %v839 = vunpack.c.l.b16 %v544
      %v840 = vunpack.c.l.b16 %v545
      %v841 = vunpack.c.l.b16 %v546
      %v842 = vunpack.c.l.b16 %v547
      %v843 = vunpack.c.l.b16 %v548
      %v844 = vunpack.c.l.b16 %v549
      %v845 = vunpack.c.l.b16 %v550
      %v846 = vunpack.c.l.b16 %v551
      %v847 = vunpack.c.l.b16 %v552
      %v848 = vunpack.c.l.b16 %v553
      %v849 = vunpack.c.l.b16 %v554
      %v850 = vunpack.c.l.b16 %v555
      %v851 = vunpack.c.l.b16 %v556
      %v852 = vunpack.c.l.b16 %v557
      %v853 = vunpack.c.l.b16 %v558
      %v854 = vunpack.c.l.b16 %v559
      %v855 = vunpack.c.l.b16 %v560
      %v856 = vunpack.c.l.b16 %v561
      %v857 = vunpack.c.l.b16 %v562
      %v858 = vunpack.c.l.b16 %v563
      %v859 = vunpack.c.l.b16 %v564
      %v860 = vunpack.c.l.b16 %v565
      %v861 = vunpack.c.l.b16 %v566
      %v862 = vunpack.c.l.b16 %v567
      %v863 = vunpack.c.l.b16 %v568
      %v864 = vunpack.c.l.b16 %v569
      %v865 = vunpack.c.l.b16 %v570
      %v866 = vunpack.c.l.b16 %v571
      %v867 = vunpack.c.l.b16 %v572
      %v868 = vunpack.c.l.b16 %v573
      %v869 = vunpack.c.l.b16 %v574
      %v870 = vunpack.c.l.b16 %v575
      %v871 = vunpack.c.l.b16 %v576
      %v872 = vunpack.c.l.b16 %v577
      %v873 = vunpack.c.l.b16 %v578
      %v874 = vunpack.c.l.b16 %v579
      %v875 = vunpack.c.l.b16 %v580
      %v876 = vunpack.c.l.b16 %v581
      %v877 = vunpack.c.l.b16 %v582
      %v878 = vunpack.c.l.b16 %v583
      %v879 = vunpack.c.l.b16 %v584
      %v880 = vunpack.c.l.b16 %v585
      %v881 = vunpack.c.l.b16 %v586
      %v882 = vunpack.c.l.b16 %v587
      %v883 = vunpack.c.l.b16 %v588
      %v884 = vunpack.c.l.b16 %v589
      %v885 = vunpack.c.l.b16 %v590
      %v886 = vunpack.c.l.b16 %v591
      %v887 = vunpack.c.l.b16 %v592
      %v888 = vunpack.c.l.b16 %v593
      %v889 = vunpack.c.l.b16 %v594
      %v890 = vunpack.c.l.b16 %v595
      %v891 = vunpack.c.l.b16 %v596
      %v892 = vunpack.c.l.b16 %v597
      %v893 = vunpack.c.l.b16 %v598
      %v894 = vunpack.c.l.b16 %v599
      %v895 = vunpack.c.l.b16 %v600
      %v896 = vunpack.c.l.b16 %v601
      %v897 = vunpack.c.l.b16 %v602
      %v898 = vunpack.c.l.b16 %v603
      %v899 = vunpack.c.l.b16 %v604
      %v900 = vunpack.c.l.b16 %v605
      %v901 = vunpack.c.l.b16 %v606
      %v902 = vunpack.c.l.b16 %v607
      %v903 = vunpack.c.l.b16 %v608
      %v904 = vunpack.c.l.b16 %v609
      %v905 = vunpack.c.l.b16 %v610
      %v906 = vunpack.c.l.b16 %v611
      %v907 = vunpack.c.l.b16 %v612
      %v908 = vunpack.c.l.b16 %v613
      %v909 = vunpack.c.l.b16 %v614
      %v910 = vunpack.c.l.b16 %v615
      %v911 = vunpack.c.l.b16 %v616
      %v912 = vunpack.c.l.b16 %v617
      %v913 = vunpack.c.l.b16 %v618
      %v914 = vunpack.c.l.b16 %v619
      %v915 = vunpack.c.l.b16 %v620
      %v916 = vunpack.c.l.b16 %v621
      %v917 = vunpack.c.l.b16 %v622
      %v918 = vunpack.c.l.b16 %v623
      %v919 = vunpack.c.l.b16 %v624
      %v920 = vunpack.c.l.b16 %v625
      %v921 = vunpack.c.l.b16 %v626
      %v922 = vunpack.c.l.b16 %v627
      %v923 = vunpack.c.l.b16 %v628
      %v924 = vunpack.c.l.b16 %v629
      %v925 = vunpack.c.l.b16 %v630
      %v926 = vpack.c.b16 %v783, %v782
      %v927 = vpack.c.b16 %v785, %v784
      %v928 = vpack.c.b16 %v787, %v786
      %v929 = vpack.c.b16 %v789, %v788
      %v930 = vpack.c.b16 %v791, %v790
      %v931 = vpack.c.b16 %v793, %v792
      %v932 = vpack.c.b16 %v795, %v794
      %v933 = vpack.c.b16 %v797, %v796
      %v934 = vpack.c.b16 %v799, %v798
      %v935 = vpack.c.b16 %v801, %v800
      %v936 = vpack.c.b16 %v803, %v802
      %v937 = vpack.c.b16 %v805, %v804
      %v938 = vpack.c.b16 %v807, %v806
      %v939 = vpack.c.b16 %v809, %v808
      %v940 = vpack.c.b16 %v811, %v810
      %v941 = vpack.c.b16 %v813, %v812
      %v942 = vpack.c.b16 %v815, %v814
      %v943 = vpack.c.b16 %v817, %v816
      %v944 = vpack.c.b16 %v819, %v818
      %v945 = vpack.c.b16 %v821, %v820
      %v946 = vpack.c.b16 %v823, %v822
      %v947 = vpack.c.b16 %v825, %v824
      %v948 = vpack.c.b16 %v827, %v826
      %v949 = vpack.c.b16 %v829, %v828
      %v950 = vpack.c.b16 %v831, %v830
      %v951 = vpack.c.b16 %v833, %v832
      %v952 = vpack.c.b16 %v835, %v834
      %v953 = vpack.c.b16 %v837, %v836
      %v954 = vpack.c.b16 %v839, %v838
      %v955 = vpack.c.b16 %v841, %v840
      %v956 = vpack.c.b16 %v843, %v842
      %v957 = vpack.c.b16 %v845, %v844
      %v958 = vpack.c.b16 %v847, %v846
      %v959 = vpack.c.b16 %v849, %v848
      %v960 = vpack.c.b16 %v851, %v850
      %v961 = vpack.c.b16 %v853, %v852
      %v962 = vpack.c.b16 %v855, %v854
      %v963 = vpack.c.b16 %v857, %v856
      %v964 = vpack.c.b16 %v859, %v858
      %v965 = vpack.c.b16 %v861, %v860
      %v966 = vpack.c.b16 %v863, %v862
      %v967 = vpack.c.b16 %v865, %v864
      %v968 = vpack.c.b16 %v867, %v866
      %v969 = vpack.c.b16 %v869, %v868
      %v970 = vpack.c.b16 %v871, %v870
      %v971 = vpack.c.b16 %v873, %v872
      %v972 = vpack.c.b16 %v875, %v874
      %v973 = vpack.c.b16 %v877, %v876
      %v974 = vpack.c.b16 %v879, %v878
      %v975 = vpack.c.b16 %v881, %v880
      %v976 = vpack.c.b16 %v883, %v882
      %v977 = vpack.c.b16 %v885, %v884
      %v978 = vpack.c.b16 %v887, %v886
      %v979 = vpack.c.b16 %v889, %v888
      %v980 = vpack.c.b16 %v891, %v890
      %v981 = vpack.c.b16 %v893, %v892
      %v982 = vpack.c.b16 %v895, %v894
      %v983 = vpack.c.b16 %v897, %v896
      %v984 = vpack.c.b16 %v899, %v898
      %v985 = vpack.c.b16 %v901, %v900
      %v986 = vpack.c.b16 %v903, %v902
      %v987 = vpack.c.b16 %v905, %v904
      %v988 = vpack.c.b16 %v907, %v906
      %v989 = vpack.c.b16 %v909, %v908
      %v990 = vpack.c.b16 %v911, %v910
      %v991 = vpack.c.b16 %v913, %v912
      %v992 = vpack.c.b16 %v915, %v914
      %v993 = vpack.c.b16 %v917, %v916
      %v994 = vpack.c.b16 %v919, %v918
      %v995 = vpack.c.b16 %v921, %v920
      %v996 = vpack.c.b16 %v923, %v922
      %v997 = vpack.c.b16 %v925, %v924
      %1070 = vmatprep.subr.bf16.mxu0 0
      %1071 = vmatpush1.bf16.msra.mxu0 %v926
      %1072 = vmatprep.subr.bf16.mxu0 0
      %1073 = vmatpush1.bf16.msra.mxu0 %v927
      %1074 = vmatprep.subr.bf16.mxu0 0
      %1075 = vmatpush1.bf16.msra.mxu0 %v928
      %1076 = vmatprep.subr.bf16.mxu0 0
      %1077 = vmatpush1.bf16.msra.mxu0 %v929
      %1078 = vmatprep.subr.bf16.mxu0 0
      %1079 = vmatpush1.bf16.msra.mxu0 %v930
      %1080 = vmatprep.subr.bf16.mxu0 0
      %1081 = vmatpush1.bf16.msra.mxu0 %v931
      %1082 = vmatprep.subr.bf16.mxu0 0
      %1083 = vmatpush1.bf16.msra.mxu0 %v932
      %1084 = vmatprep.subr.bf16.mxu0 0
      %1085 = vmatpush1.bf16.msra.mxu0 %v933
      %1086 = vmatprep.subr.bf16.mxu0 0
      %1087 = vmatpush1.bf16.msra.mxu0 %v934
      %1088 = vmatprep.subr.bf16.mxu0 0
      %1089 = vmatpush1.bf16.msra.mxu0 %v935
      %1090 = vmatprep.subr.bf16.mxu0 0
      %1091 = vmatpush1.bf16.msra.mxu0 %v936
      %1092 = vmatprep.subr.bf16.mxu0 0
      %1093 = vmatpush1.bf16.msra.mxu0 %v937
      %1094 = vmatprep.subr.bf16.mxu0 0
      %1095 = vmatpush1.bf16.msra.mxu0 %v938
      %1096 = vmatprep.subr.bf16.mxu0 0
      %1097 = vmatpush1.bf16.msra.mxu0 %v939
      %1098 = vmatprep.subr.bf16.mxu0 0
      %1099 = vmatpush1.bf16.msra.mxu0 %v940
      %1100 = vmatprep.subr.bf16.mxu0 0
      %1101 = vmatpush1.bf16.msra.mxu0 %v941
      %1102 = vmatprep.mubr.bf16.mxu0 %v479
      %1103 = vmatmul.mubr.bf16.gmra.mrb[0].mxu0 %v478
      %v1104 = vpop.f32.mrb[0].mxu0
      %v1105 = vadd.f32 %v636, %v1104
      %v1106 = vpop.f32.mrb[0].mxu0
      %v1107 = vpop.f32.mrb[0].mxu0
      %v1108 = vadd.f32 %v636, %v1107
      %v1109 = vpop.f32.mrb[0].mxu0
      %1110 = vdwg.mxu0
      %1111 = vmatprep.subr.bf16.mxu0 0
      %1112 = vmatpush1.bf16.msra.mxu0 %v942
      %1113 = vmatprep.subr.bf16.mxu0 0
      %1114 = vmatpush1.bf16.msra.mxu0 %v943
      %1115 = vmatprep.subr.bf16.mxu0 0
      %1116 = vmatpush1.bf16.msra.mxu0 %v944
      %1117 = vmatprep.subr.bf16.mxu0 0
      %1118 = vmatpush1.bf16.msra.mxu0 %v945
      %1119 = vmatprep.subr.bf16.mxu0 0
      %1120 = vmatpush1.bf16.msra.mxu0 %v946
      %1121 = vmatprep.subr.bf16.mxu0 0
      %1122 = vmatpush1.bf16.msra.mxu0 %v947
      %1123 = vmatprep.subr.bf16.mxu0 0
      %1124 = vmatpush1.bf16.msra.mxu0 %v948
      %1125 = vmatprep.subr.bf16.mxu0 0
      %1126 = vmatpush1.bf16.msra.mxu0 %v949
      %1127 = vmatprep.subr.bf16.mxu0 0
      %1128 = vmatpush1.bf16.msra.mxu0 %v950
      %1129 = vmatprep.subr.bf16.mxu0 0
      %1130 = vmatpush1.bf16.msra.mxu0 %v951
      %1131 = vmatprep.subr.bf16.mxu0 0
      %1132 = vmatpush1.bf16.msra.mxu0 %v952
      %1133 = vmatprep.subr.bf16.mxu0 0
      %1134 = vmatpush1.bf16.msra.mxu0 %v953
      %1135 = vmatprep.subr.bf16.mxu0 0
      %1136 = vmatpush1.bf16.msra.mxu0 %v954
      %1137 = vmatprep.subr.bf16.mxu0 0
      %1138 = vmatpush1.bf16.msra.mxu0 %v955
      %1139 = vmatprep.subr.bf16.mxu0 0
      %1140 = vmatpush1.bf16.msra.mxu0 %v956
      %1141 = vmatprep.subr.bf16.mxu0 0
      %1142 = vmatpush1.bf16.msra.mxu0 %v957
      %1143 = vmatprep.mubr.bf16.mxu0 %v481
      %1144 = vmatmul.mubr.bf16.gmra.mrb[0].mxu0 %v480
      %v1145 = vpop.f32.mrb[0].mxu0
      %v1146 = vadd.f32 %v1105, %v1145
      %v1147 = vpop.f32.mrb[0].mxu0
      %v1148 = vpop.f32.mrb[0].mxu0
      %v1149 = vadd.f32 %v1108, %v1148
      %v1150 = vpop.f32.mrb[0].mxu0
      %1151 = vdwg.mxu0
      %1152 = vmatprep.subr.bf16.mxu0 0
      %1153 = vmatpush1.bf16.msra.mxu0 %v958
      %1154 = vmatprep.subr.bf16.mxu0 0
      %1155 = vmatpush1.bf16.msra.mxu0 %v959
      %1156 = vmatprep.subr.bf16.mxu0 0
      %1157 = vmatpush1.bf16.msra.mxu0 %v960
      %1158 = vmatprep.subr.bf16.mxu0 0
      %1159 = vmatpush1.bf16.msra.mxu0 %v961
      %1160 = vmatprep.subr.bf16.mxu0 0
      %1161 = vmatpush1.bf16.msra.mxu0 %v962
      %1162 = vmatprep.subr.bf16.mxu0 0
      %1163 = vmatpush1.bf16.msra.mxu0 %v963
      %1164 = vmatprep.subr.bf16.mxu0 0
      %1165 = vmatpush1.bf16.msra.mxu0 %v964
      %1166 = vmatprep.subr.bf16.mxu0 0
      %1167 = vmatpush1.bf16.msra.mxu0 %v965
      %1168 = vmatprep.subr.bf16.mxu0 0
      %1169 = vmatpush1.bf16.msra.mxu0 %v966
      %1170 = vmatprep.subr.bf16.mxu0 0
      %1171 = vmatpush1.bf16.msra.mxu0 %v967
      %1172 = vmatprep.subr.bf16.mxu0 0
      %1173 = vmatpush1.bf16.msra.mxu0 %v968
      %1174 = vmatprep.subr.bf16.mxu0 0
      %1175 = vmatpush1.bf16.msra.mxu0 %v969
      %1176 = vmatprep.subr.bf16.mxu0 0
      %1177 = vmatpush1.bf16.msra.mxu0 %v970
      %1178 = vmatprep.subr.bf16.mxu0 0
      %1179 = vmatpush1.bf16.msra.mxu0 %v971
      %1180 = vmatprep.subr.bf16.mxu0 0
      %1181 = vmatpush1.bf16.msra.mxu0 %v972
      %1182 = vmatprep.subr.bf16.mxu0 0
      %1183 = vmatpush1.bf16.msra.mxu0 %v973
      %1184 = vmatprep.mubr.bf16.mxu0 %v483
      %1185 = vmatmul.mubr.bf16.gmra.mrb[0].mxu0 %v482
      %v1186 = vpop.f32.mrb[0].mxu0
      %v1187 = vadd.f32 %v1146, %v1186
      %v1188 = vpop.f32.mrb[0].mxu0
      %v1189 = vpop.f32.mrb[0].mxu0
      %v1190 = vadd.f32 %v1149, %v1189
      %v1191 = vpop.f32.mrb[0].mxu0
      %1192 = vdwg.mxu0
      %1193 = vmatprep.subr.bf16.mxu0 0
      %1194 = vmatpush1.bf16.msra.mxu0 %v974
      %1195 = vmatprep.subr.bf16.mxu0 0
      %1196 = vmatpush1.bf16.msra.mxu0 %v975
      %1197 = vmatprep.subr.bf16.mxu0 0
      %1198 = vmatpush1.bf16.msra.mxu0 %v976
      %1199 = vmatprep.subr.bf16.mxu0 0
      %1200 = vmatpush1.bf16.msra.mxu0 %v977
      %1201 = vmatprep.subr.bf16.mxu0 0
      %1202 = vmatpush1.bf16.msra.mxu0 %v978
      %1203 = vmatprep.subr.bf16.mxu0 0
      %1204 = vmatpush1.bf16.msra.mxu0 %v979
      %1205 = vmatprep.subr.bf16.mxu0 0
      %1206 = vmatpush1.bf16.msra.mxu0 %v980
      %1207 = vmatprep.subr.bf16.mxu0 0
      %1208 = vmatpush1.bf16.msra.mxu0 %v981
      %1209 = vmatprep.subr.bf16.mxu0 0
      %1210 = vmatpush1.bf16.msra.mxu0 %v982
      %1211 = vmatprep.subr.bf16.mxu0 0
      %1212 = vmatpush1.bf16.msra.mxu0 %v983
      %1213 = vmatprep.subr.bf16.mxu0 0
      %1214 = vmatpush1.bf16.msra.mxu0 %v984
      %1215 = vmatprep.subr.bf16.mxu0 0
      %1216 = vmatpush1.bf16.msra.mxu0 %v985
      %1217 = vmatprep.subr.bf16.mxu0 0
      %1218 = vmatpush1.bf16.msra.mxu0 %v986
      %1219 = vmatprep.subr.bf16.mxu0 0
      %1220 = vmatpush1.bf16.msra.mxu0 %v987
      %1221 = vmatprep.subr.bf16.mxu0 0
      %1222 = vmatpush1.bf16.msra.mxu0 %v988
      %1223 = vmatprep.subr.bf16.mxu0 0
      %1224 = vmatpush1.bf16.msra.mxu0 %v989
      %1225 = vmatprep.mubr.bf16.mxu0 %v485
      %1226 = vmatmul.mubr.bf16.gmra.mrb[0].mxu0 %v484
      %v1227 = vpop.f32.mrb[0].mxu0
      %v1228 = vadd.f32 %v1187, %v1227
      %v1229 = vpop.f32.mrb[0].mxu0
      %v1230 = vpop.f32.mrb[0].mxu0
      %v1231 = vadd.f32 %v1190, %v1230
      %v1232 = vpop.f32.mrb[0].mxu0
      %1233 = vdwg.mxu0
      %1234 = vmatprep.subr.bf16.mxu0 0
      %1235 = vmatpush1.bf16.msra.mxu0 %v990
      %1236 = vmatprep.subr.bf16.mxu0 0
      %1237 = vmatpush1.bf16.msra.mxu0 %v991
      %1238 = vmatprep.subr.bf16.mxu0 0
      %1239 = vmatpush1.bf16.msra.mxu0 %v992
      %1240 = vmatprep.subr.bf16.mxu0 0
      %1241 = vmatpush1.bf16.msra.mxu0 %v993
      %1242 = vmatprep.subr.bf16.mxu0 0
      %1243 = vmatpush1.bf16.msra.mxu0 %v994
      %1244 = vmatprep.subr.bf16.mxu0 0
      %1245 = vmatpush1.bf16.msra.mxu0 %v995
      %1246 = vmatprep.subr.bf16.mxu0 0
      %1247 = vmatpush1.bf16.msra.mxu0 %v996
      %1248 = vmatprep.subr.bf16.mxu0 0
      %1249 = vmatpush1.bf16.msra.mxu0 %v997
      %1250 = vmatprep.subr.bf16.mxu0 0
      %1251 = vmatpush1.bf16.msra.mxu0 0
      %1252 = vmatprep.subr.bf16.mxu0 0
      %1253 = vmatpush1.bf16.msra.mxu0 0
      %1254 = vmatprep.subr.bf16.mxu0 0
      %1255 = vmatpush1.bf16.msra.mxu0 0
      %1256 = vmatprep.subr.bf16.mxu0 0
      %1257 = vmatpush1.bf16.msra.mxu0 0
      %1258 = vmatprep.subr.bf16.mxu0 0
      %1259 = vmatpush1.bf16.msra.mxu0 0
      %1260 = vmatprep.subr.bf16.mxu0 0
      %1261 = vmatpush1.bf16.msra.mxu0 0
      %1262 = vmatprep.subr.bf16.mxu0 0
      %1263 = vmatpush1.bf16.msra.mxu0 0
      %1264 = vmatprep.subr.bf16.mxu0 0
      %1265 = vmatpush1.bf16.msra.mxu0 0
      %1266 = vmatprep.mubr.bf16.mxu0 0
      %1267 = vmatmul.mubr.bf16.gmra.mrb[0].mxu0 %v486
      %v1268 = vpop.f32.mrb[0].mxu0
      %v1269 = vadd.f32 %v1228, %v1268
      %v1270 = vpop.f32.mrb[0].mxu0
      %v1271 = vpop.f32.mrb[0].mxu0
      %v1272 = vadd.f32 %v1231, %v1271
      %v1273 = vpop.f32.mrb[0].mxu0
      %1274 = vdwg.mxu0
      %v1275 = vmax.f32 %v1269, 0.0
      %v1276 = vmax.f32 %v1272, 0.0
      %v1279 = vrot.slane %v1275, 7
      %v1280 = vrot.slane %v1276, 7
      %v1281 = vsel %vm251, %v1279, %v1280
      %1282 = vrot.lane.b32.xlu0 %v1279, 8
      %v1283 = vpop.permute.xlu0 %1282
      %1284 = vrot.lane.b32.xlu0 %v1281, 8
      %v1285 = vpop.permute.xlu0 %1284
      %1286 = vrot.lane.b32.xlu0 %v1280, 8
      %v1287 = vpop.permute.xlu0 %1286
      %1291 = vst.msk [vmem:[#allocation2] sm:$0xfe] %vm264, %v1283
      %1292 = vst.msk [vmem:[#allocation2 + $0x8] sm:$0xfe] %vm235, %v1283
      %1293 = vst.msk [vmem:[#allocation2 + $0x10] sm:$0xff] %vm267, %v1285
      %1294 = vst.msk [vmem:[#allocation2 + $0x18] sm:$0xff] %vm237, %v1285
      %1295 = vst.msk [vmem:[#allocation2 + $0x20] sm:$0x1] %vm270, %v1287
      %1296 = vst.msk [vmem:[#allocation2 + $0x28] sm:$0x1] %vm239, %v1287
      %v1297 = vld [vmem:[#allocation2] sm:$0xff]
      %v1298 = vld [vmem:[#allocation2 + $0x10] sm:$0xff]
      %v1299 = vpack.c.bf16 %v1298, %v1297
      %1300 = vst [vmem:[#allocation3] sm:$0xff] %v1299
      %v1301 = vld [vmem:[#allocation2] sm:$0xff]
      %v1302 = vld [vmem:[#allocation2 + $0x8] sm:$0xff]
      %v1303 = vld [vmem:[#allocation2 + $0x10] sm:$0xff]
      %v1304 = vld [vmem:[#allocation2 + $0x18] sm:$0xff]
      %v1305 = vpack.c.bf16 %v1303, %v1301
      %v1306 = vpack.c.bf16 %v1304, %v1302
      %1309 = vrot.lane.b32.xlu0 %v1305, 120
      %v1310 = vpop.permute.xlu0 %1309
      %1311 = vrot.lane.b32.xlu0 %v1306, 120
      %v1312 = vpop.permute.xlu0 %1311
      %v1313 = vsel %vm289, %v1310, %v1312
      %1315 = vst [vmem:[#allocation3 + $0x8] sm:$0xff] %v1313
      %v1316 = vld [vmem:[#allocation2] sm:$0xff]
      %v1317 = vld [vmem:[#allocation2 + $0x8] sm:$0xff]
      %v1318 = vld [vmem:[#allocation2 + $0x10] sm:$0xff]
      %v1319 = vld [vmem:[#allocation2 + $0x18] sm:$0xff]
      %v1320 = vpack.c.bf16 %v1318, %v1316
      %v1321 = vpack.c.bf16 %v1319, %v1317
      %1324 = vrot.lane.b32.xlu0 %v1320, 112
      %v1325 = vpop.permute.xlu0 %1324
      %1326 = vrot.lane.b32.xlu0 %v1321, 112
      %v1327 = vpop.permute.xlu0 %1326
      %v1328 = vsel %vm305, %v1325, %v1327
      %1330 = vst [vmem:[#allocation3 + $0x10] sm:$0xff] %v1328
      %v1331 = vld [vmem:[#allocation2] sm:$0xfe]
      %v1332 = vld [vmem:[#allocation2 + $0x10] sm:$0xff]
      %v1333 = vld [vmem:[#allocation2 + $0x20] sm:$0x1]
      %v1334 = vpack.c.bf16 %v1332, %v1331
      %v1335 = vpack.c.bf16 %v1333, %v1333
      %v1337 = vshrl.u32 %v1334, 16
      %v1339 = vshll.u32 %v1334, 16
      %v1341 = vrot.slane %v1339, 1
      %v1342 = vor.u32 %v1337, %v1341
      %v1344 = vshll.u32 %v1335, 16
      %v1346 = vrot.slane %v1344, 1
      %v1347 = vsel %vm314, %v1342, %v1346
      %1349 = vst [vmem:[#allocation3 + $0x18] sm:$0xff] %v1347
      %v1350 = vld [vmem:[#allocation2] sm:$0xfe]
      %v1351 = vld [vmem:[#allocation2 + $0x8] sm:$0xfe]
      %v1352 = vld [vmem:[#allocation2 + $0x10] sm:$0xff]
      %v1353 = vld [vmem:[#allocation2 + $0x18] sm:$0xff]
      %v1354 = vld [vmem:[#allocation2 + $0x20] sm:$0x1]
      %v1355 = vld [vmem:[#allocation2 + $0x28] sm:$0x1]
      %v1356 = vpack.c.bf16 %v1352, %v1350
      %v1357 = vpack.c.bf16 %v1353, %v1351
      %v1358 = vpack.c.bf16 %v1354, %v1354
      %v1359 = vpack.c.bf16 %v1355, %v1355
      %v1361 = vshrl.u32 %v1356, 16
      %v1363 = vshll.u32 %v1356, 16
      %v1365 = vrot.slane %v1363, 1
      %v1366 = vor.u32 %v1361, %v1365
      %v1368 = vshll.u32 %v1358, 16
      %v1370 = vrot.slane %v1368, 1
      %v1371 = vsel %vm314, %v1366, %v1370
      %v1373 = vshrl.u32 %v1357, 16
      %v1375 = vshll.u32 %v1357, 16
      %v1377 = vrot.slane %v1375, 1
      %v1378 = vor.u32 %v1373, %v1377
      %v1380 = vshll.u32 %v1359, 16
      %v1382 = vrot.slane %v1380, 1
      %v1383 = vsel %vm314, %v1378, %v1382
      %1384 = vrot.lane.b32.xlu0 %v1371, 120
      %v1385 = vpop.permute.xlu0 %1384
      %1386 = vrot.lane.b32.xlu0 %v1383, 120
      %v1387 = vpop.permute.xlu0 %1386
      %v1388 = vsel %vm289, %v1385, %v1387
      %1390 = vst [vmem:[#allocation3 + $0x20] sm:$0xff] %v1388
      %v1391 = vld [vmem:[#allocation2] sm:$0xfe]
      %v1392 = vld [vmem:[#allocation2 + $0x8] sm:$0xfe]
      %v1393 = vld [vmem:[#allocation2 + $0x10] sm:$0xff]
      %v1394 = vld [vmem:[#allocation2 + $0x18] sm:$0xff]
      %v1395 = vld [vmem:[#allocation2 + $0x20] sm:$0x1]
      %v1396 = vld [vmem:[#allocation2 + $0x28] sm:$0x1]
      %v1397 = vpack.c.bf16 %v1393, %v1391
      %v1398 = vpack.c.bf16 %v1394, %v1392
      %v1399 = vpack.c.bf16 %v1395, %v1395
      %v1400 = vpack.c.bf16 %v1396, %v1396
      %v1402 = vshrl.u32 %v1397, 16
      %v1404 = vshll.u32 %v1397, 16
      %v1406 = vrot.slane %v1404, 1
      %v1407 = vor.u32 %v1402, %v1406
      %v1409 = vshll.u32 %v1399, 16
      %v1411 = vrot.slane %v1409, 1
      %v1412 = vsel %vm314, %v1407, %v1411
      %v1414 = vshrl.u32 %v1398, 16
      %v1416 = vshll.u32 %v1398, 16
      %v1418 = vrot.slane %v1416, 1
      %v1419 = vor.u32 %v1414, %v1418
      %v1421 = vshll.u32 %v1400, 16
      %v1423 = vrot.slane %v1421, 1
      %v1424 = vsel %vm314, %v1419, %v1423
      %1425 = vrot.lane.b32.xlu0 %v1412, 112
      %v1426 = vpop.permute.xlu0 %1425
      %1427 = vrot.lane.b32.xlu0 %v1424, 112
      %v1428 = vpop.permute.xlu0 %1427
      %v1429 = vsel %vm305, %v1426, %v1428
      %1431 = vst [vmem:[#allocation3 + $0x28] sm:$0xff] %v1429
      %v1432 = vld [vmem:[#allocation2] sm:$0xfc]
      %v1433 = vld [vmem:[#allocation2 + $0x10] sm:$0xff]
      %v1434 = vld [vmem:[#allocation2 + $0x20] sm:$0x3]
      %v1435 = vpack.c.bf16 %v1433, %v1432
      %v1436 = vpack.c.bf16 %v1434, %v1434
      %v1439 = vrot.slane %v1435, 1
      %v1440 = vrot.slane %v1436, 1
      %v1441 = vsel %vm418, %v1439, %v1440
      %1443 = vst [vmem:[#allocation3 + $0x30] sm:$0xff] %v1441
      %v1444 = vld [vmem:[#allocation2] sm:$0xfc]
      %v1445 = vld [vmem:[#allocation2 + $0x8] sm:$0xfc]
      %v1446 = vld [vmem:[#allocation2 + $0x10] sm:$0xff]
      %v1447 = vld [vmem:[#allocation2 + $0x18] sm:$0xff]
      %v1448 = vld [vmem:[#allocation2 + $0x20] sm:$0x3]
      %v1449 = vld [vmem:[#allocation2 + $0x28] sm:$0x3]
      %v1450 = vpack.c.bf16 %v1446, %v1444
      %v1451 = vpack.c.bf16 %v1447, %v1445
      %v1452 = vpack.c.bf16 %v1448, %v1448
      %v1453 = vpack.c.bf16 %v1449, %v1449
      %v1458 = vrot.slane %v1450, 1
      %v1459 = vrot.slane %v1452, 1
      %v1460 = vsel %vm418, %v1458, %v1459
      %v1461 = vrot.slane %v1451, 1
      %v1462 = vrot.slane %v1453, 1
      %v1463 = vsel %vm418, %v1461, %v1462
      %1464 = vrot.lane.b32.xlu0 %v1460, 120
      %v1465 = vpop.permute.xlu0 %1464
      %1466 = vrot.lane.b32.xlu0 %v1463, 120
      %v1467 = vpop.permute.xlu0 %1466
      %v1468 = vsel %vm289, %v1465, %v1467
      %1470 = vst [vmem:[#allocation3 + $0x38] sm:$0xff] %v1468
      %v1471 = vld [vmem:[#allocation2] sm:$0xfc]
      %v1472 = vld [vmem:[#allocation2 + $0x8] sm:$0xfc]
      %v1473 = vld [vmem:[#allocation2 + $0x10] sm:$0xff]
      %v1474 = vld [vmem:[#allocation2 + $0x18] sm:$0xff]
      %v1475 = vld [vmem:[#allocation2 + $0x20] sm:$0x3]
      %v1476 = vld [vmem:[#allocation2 + $0x28] sm:$0x3]
      %v1477 = vpack.c.bf16 %v1473, %v1471
      %v1478 = vpack.c.bf16 %v1474, %v1472
      %v1479 = vpack.c.bf16 %v1475, %v1475
      %v1480 = vpack.c.bf16 %v1476, %v1476
      %v1485 = vrot.slane %v1477, 1
      %v1486 = vrot.slane %v1479, 1
      %v1487 = vsel %vm418, %v1485, %v1486
      %v1488 = vrot.slane %v1478, 1
      %v1489 = vrot.slane %v1480, 1
      %v1490 = vsel %vm418, %v1488, %v1489
      %1491 = vrot.lane.b32.xlu0 %v1487, 112
      %v1492 = vpop.permute.xlu0 %1491
      %1493 = vrot.lane.b32.xlu0 %v1490, 112
      %v1494 = vpop.permute.xlu0 %1493
      %v1495 = vsel %vm305, %v1492, %v1494
      %1497 = vst [vmem:[#allocation3 + $0x40] sm:$0xff] %v1495
      %v1498 = vld [vmem:[#allocation3] sm:$0xff]
      %v1499 = vld [vmem:[#allocation3 + $0x8] sm:$0xff]
      %v1500 = vld [vmem:[#allocation3 + $0x10] sm:$0xff]
      %v1501 = vld [vmem:[#allocation3 + $0x18] sm:$0xff]
      %v1502 = vld [vmem:[#allocation3 + $0x20] sm:$0xff]
      %v1503 = vld [vmem:[#allocation3 + $0x28] sm:$0xff]
      %v1504 = vld [vmem:[#allocation3 + $0x30] sm:$0xff]
      %v1505 = vld [vmem:[#allocation3 + $0x38] sm:$0xff]
      %v1506 = vld [vmem:[#allocation3 + $0x40] sm:$0xff]
      %v1507 = vld [vmem:[%s3] sm:$0xf]
      %v1508 = vld [vmem:[%s3 + $0x4] sm:$0xf]
      %v1509 = vld [vmem:[%s3 + $0x8] sm:$0xf]
      %v1510 = vld [vmem:[%s3 + $0xc] sm:$0xf]
      %v1511 = vld [vmem:[%s3 + $0x10] sm:$0xf]
      %v1512 = vld [vmem:[%s3 + $0x14] sm:$0xf]
      %v1513 = vld [vmem:[%s3 + $0x18] sm:$0xf]
      %v1514 = vld [vmem:[%s3 + $0x1c] sm:$0xf]
      %v1515 = vld [vmem:[%s3 + $0x20] sm:$0xf]
      %v1516 = vld [vmem:[%s3 + $0x24] sm:$0xf]
      %v1517 = vld [vmem:[%s3 + $0x28] sm:$0xf]
      %v1518 = vld [vmem:[%s3 + $0x2c] sm:$0xf]
      %v1519 = vld [vmem:[%s3 + $0x30] sm:$0xf]
      %v1520 = vld [vmem:[%s3 + $0x34] sm:$0xf]
      %v1521 = vld [vmem:[%s3 + $0x38] sm:$0xf]
      %v1522 = vld [vmem:[%s3 + $0x3c] sm:$0xf]
      %v1523 = vld [vmem:[%s3 + $0x40] sm:$0xf]
      %v1524 = vld [vmem:[%s3 + $0x44] sm:$0xf]
      %v1525 = vld [vmem:[%s3 + $0x48] sm:$0xf]
      %v1526 = vld [vmem:[%s3 + $0x4c] sm:$0xf]
      %v1527 = vld [vmem:[%s3 + $0x50] sm:$0xf]
      %v1528 = vld [vmem:[%s3 + $0x54] sm:$0xf]
      %v1529 = vld [vmem:[%s3 + $0x58] sm:$0xf]
      %v1530 = vld [vmem:[%s3 + $0x5c] sm:$0xf]
      %v1531 = vld [vmem:[%s3 + $0x60] sm:$0xf]
      %v1532 = vld [vmem:[%s3 + $0x64] sm:$0xf]
      %v1533 = vld [vmem:[%s3 + $0x68] sm:$0xf]
      %v1534 = vld [vmem:[%s3 + $0x6c] sm:$0xf]
      %v1535 = vld [vmem:[%s3 + $0x70] sm:$0xf]
      %v1536 = vld [vmem:[%s3 + $0x74] sm:$0xf]
      %v1537 = vld [vmem:[%s3 + $0x78] sm:$0xf]
      %v1538 = vld [vmem:[%s3 + $0x7c] sm:$0xf]
      %v1539 = vld [vmem:[%s3 + $0x80] sm:$0xf]
      %v1540 = vld [vmem:[%s3 + $0x84] sm:$0xf]
      %v1541 = vld [vmem:[%s3 + $0x88] sm:$0xf]
      %v1542 = vld [vmem:[%s3 + $0x8c] sm:$0xf]
      %v1543 = vld [vmem:[%s3 + $0x90] sm:$0xf]
      %v1544 = vld [vmem:[%s3 + $0x94] sm:$0xf]
      %v1545 = vld [vmem:[%s3 + $0x98] sm:$0xf]
      %v1546 = vld [vmem:[%s3 + $0x9c] sm:$0xf]
      %v1547 = vld [vmem:[%s3 + $0xa0] sm:$0xf]
      %v1548 = vld [vmem:[%s3 + $0xa4] sm:$0xf]
      %v1549 = vld [vmem:[%s3 + $0xa8] sm:$0xf]
      %v1550 = vld [vmem:[%s3 + $0xac] sm:$0xf]
      %v1551 = vld [vmem:[%s3 + $0xb0] sm:$0xf]
      %v1552 = vld [vmem:[%s3 + $0xb4] sm:$0xf]
      %v1553 = vld [vmem:[%s3 + $0xb8] sm:$0xf]
      %v1554 = vld [vmem:[%s3 + $0xbc] sm:$0xf]
      %v1555 = vld [vmem:[%s3 + $0xc0] sm:$0xf]
      %v1556 = vld [vmem:[%s3 + $0xc4] sm:$0xf]
      %v1557 = vld [vmem:[%s3 + $0xc8] sm:$0xf]
      %v1558 = vld [vmem:[%s3 + $0xcc] sm:$0xf]
      %v1559 = vld [vmem:[%s3 + $0xd0] sm:$0xf]
      %v1560 = vld [vmem:[%s3 + $0xd4] sm:$0xf]
      %v1561 = vld [vmem:[%s3 + $0xd8] sm:$0xf]
      %v1562 = vld [vmem:[%s3 + $0xdc] sm:$0xf]
      %v1563 = vld [vmem:[%s3 + $0xe0] sm:$0xf]
      %v1564 = vld [vmem:[%s3 + $0xe4] sm:$0xf]
      %v1565 = vld [vmem:[%s3 + $0xe8] sm:$0xf]
      %v1566 = vld [vmem:[%s3 + $0xec] sm:$0xf]
      %v1567 = vld [vmem:[%s3 + $0xf0] sm:$0xf]
      %v1568 = vld [vmem:[%s3 + $0xf4] sm:$0xf]
      %v1569 = vld [vmem:[%s3 + $0xf8] sm:$0xf]
      %v1570 = vld [vmem:[%s3 + $0xfc] sm:$0xf]
      %v1571 = vld [vmem:[%s3 + $0x100] sm:$0xf]
      %v1572 = vld [vmem:[%s3 + $0x104] sm:$0xf]
      %v1573 = vld [vmem:[%s3 + $0x108] sm:$0xf]
      %v1574 = vld [vmem:[%s3 + $0x10c] sm:$0xf]
      %v1575 = vld [vmem:[%s3 + $0x110] sm:$0xf]
      %v1576 = vld [vmem:[%s3 + $0x114] sm:$0xf]
      %v1577 = vld [vmem:[%s3 + $0x118] sm:$0xf]
      %v1578 = vld [vmem:[%s3 + $0x11c] sm:$0xf]
      %v1579 = vld [vmem:[%s3 + $0x120] sm:$0xf]
      %v1580 = vld [vmem:[%s3 + $0x124] sm:$0xf]
      %v1581 = vld [vmem:[%s3 + $0x128] sm:$0xf]
      %v1582 = vld [vmem:[%s3 + $0x12c] sm:$0xf]
      %v1583 = vld [vmem:[%s3 + $0x130] sm:$0xf]
      %v1584 = vld [vmem:[%s3 + $0x134] sm:$0xf]
      %v1585 = vld [vmem:[%s3 + $0x138] sm:$0xf]
      %v1586 = vld [vmem:[%s3 + $0x13c] sm:$0xf]
      %v1587 = vld [vmem:[%s3 + $0x140] sm:$0xf]
      %v1588 = vld [vmem:[%s3 + $0x144] sm:$0xf]
      %v1589 = vld [vmem:[%s3 + $0x148] sm:$0xf]
      %v1590 = vld [vmem:[%s3 + $0x14c] sm:$0xf]
      %v1591 = vld [vmem:[%s3 + $0x150] sm:$0xf]
      %v1592 = vld [vmem:[%s3 + $0x154] sm:$0xf]
      %v1593 = vld [vmem:[%s3 + $0x158] sm:$0xf]
      %v1594 = vld [vmem:[%s3 + $0x15c] sm:$0xf]
      %v1595 = vld [vmem:[%s3 + $0x160] sm:$0xf]
      %v1596 = vld [vmem:[%s3 + $0x164] sm:$0xf]
      %v1597 = vld [vmem:[%s3 + $0x168] sm:$0xf]
      %v1598 = vld [vmem:[%s3 + $0x16c] sm:$0xf]
      %v1599 = vld [vmem:[%s3 + $0x170] sm:$0xf]
      %v1600 = vld [vmem:[%s3 + $0x174] sm:$0xf]
      %v1601 = vld [vmem:[%s3 + $0x178] sm:$0xf]
      %v1602 = vld [vmem:[%s3 + $0x17c] sm:$0xf]
      %v1603 = vld [vmem:[%s3 + $0x180] sm:$0xf]
      %v1604 = vld [vmem:[%s3 + $0x184] sm:$0xf]
      %v1605 = vld [vmem:[%s3 + $0x188] sm:$0xf]
      %v1606 = vld [vmem:[%s3 + $0x18c] sm:$0xf]
      %v1607 = vld [vmem:[%s3 + $0x190] sm:$0xf]
      %v1608 = vld [vmem:[%s3 + $0x194] sm:$0xf]
      %v1609 = vld [vmem:[%s3 + $0x198] sm:$0xf]
      %v1610 = vld [vmem:[%s3 + $0x19c] sm:$0xf]
      %v1611 = vld [vmem:[%s3 + $0x1a0] sm:$0xf]
      %v1612 = vld [vmem:[%s3 + $0x1a4] sm:$0xf]
      %v1613 = vld [vmem:[%s3 + $0x1a8] sm:$0xf]
      %v1614 = vld [vmem:[%s3 + $0x1ac] sm:$0xf]
      %v1615 = vld [vmem:[%s3 + $0x1b0] sm:$0xf]
      %v1616 = vld [vmem:[%s3 + $0x1b4] sm:$0xf]
      %v1617 = vld [vmem:[%s3 + $0x1b8] sm:$0xf]
      %v1618 = vld [vmem:[%s3 + $0x1bc] sm:$0xf]
      %v1619 = vld [vmem:[%s3 + $0x1c0] sm:$0xf]
      %v1620 = vld [vmem:[%s3 + $0x1c4] sm:$0xf]
      %v1621 = vld [vmem:[%s3 + $0x1c8] sm:$0xf]
      %v1622 = vld [vmem:[%s3 + $0x1cc] sm:$0xf]
      %v1623 = vld [vmem:[%s3 + $0x1d0] sm:$0xf]
      %v1624 = vld [vmem:[%s3 + $0x1d4] sm:$0xf]
      %v1625 = vld [vmem:[%s3 + $0x1d8] sm:$0xf]
      %v1626 = vld [vmem:[%s3 + $0x1dc] sm:$0xf]
      %v1627 = vld [vmem:[%s3 + $0x1e0] sm:$0xf]
      %v1628 = vld [vmem:[%s3 + $0x1e4] sm:$0xf]
      %v1629 = vld [vmem:[%s3 + $0x1e8] sm:$0xf]
      %v1630 = vld [vmem:[%s3 + $0x1ec] sm:$0xf]
      %v1631 = vld [vmem:[%s3 + $0x1f0] sm:$0xf]
      %v1632 = vld [vmem:[%s3 + $0x1f4] sm:$0xf]
      %v1633 = vld [vmem:[%s3 + $0x1f8] sm:$0xf]
      %v1634 = vld [vmem:[%s3 + $0x1fc] sm:$0xf]
      %v1635 = vld [vmem:[%s3 + $0x200] sm:$0xf]
      %v1636 = vld [vmem:[%s3 + $0x204] sm:$0xf]
      %v1637 = vld [vmem:[%s3 + $0x208] sm:$0xf]
      %v1638 = vld [vmem:[%s3 + $0x20c] sm:$0xf]
      %v1639 = vld [vmem:[%s3 + $0x210] sm:$0xf]
      %v1640 = vld [vmem:[%s3 + $0x214] sm:$0xf]
      %v1641 = vld [vmem:[%s3 + $0x218] sm:$0xf]
      %v1642 = vld [vmem:[%s3 + $0x21c] sm:$0xf]
      %v1643 = vld [vmem:[%s3 + $0x220] sm:$0xf]
      %v1644 = vld [vmem:[%s3 + $0x224] sm:$0xf]
      %v1645 = vld [vmem:[%s3 + $0x228] sm:$0xf]
      %v1646 = vld [vmem:[%s3 + $0x22c] sm:$0xf]
      %v1647 = vld [vmem:[%s3 + $0x230] sm:$0xf]
      %v1648 = vld [vmem:[%s3 + $0x234] sm:$0xf]
      %v1649 = vld [vmem:[%s3 + $0x238] sm:$0xf]
      %v1650 = vld [vmem:[%s3 + $0x23c] sm:$0xf]
      %v1651 = vld [vmem:[%s4] sm:$0x1]
      %v1653 = vlaneseq
      %v1654 = vshrl.u32 %v1653, 7
      %v1655 = vsub.s32 0, %v1654
      %v1656 = vrot.slane %v1651, %v1655
      %v1802 = vunpack.c.l.b16 %v1507
      %v1803 = vunpack.c.l.b16 %v1508
      %v1804 = vunpack.c.l.b16 %v1509
      %v1805 = vunpack.c.l.b16 %v1510
      %v1806 = vunpack.c.l.b16 %v1511
      %v1807 = vunpack.c.l.b16 %v1512
      %v1808 = vunpack.c.l.b16 %v1513
      %v1809 = vunpack.c.l.b16 %v1514
      %v1810 = vunpack.c.l.b16 %v1515
      %v1811 = vunpack.c.l.b16 %v1516
      %v1812 = vunpack.c.l.b16 %v1517
      %v1813 = vunpack.c.l.b16 %v1518
      %v1814 = vunpack.c.l.b16 %v1519
      %v1815 = vunpack.c.l.b16 %v1520
      %v1816 = vunpack.c.l.b16 %v1521
      %v1817 = vunpack.c.l.b16 %v1522
      %v1818 = vunpack.c.l.b16 %v1523
      %v1819 = vunpack.c.l.b16 %v1524
      %v1820 = vunpack.c.l.b16 %v1525
      %v1821 = vunpack.c.l.b16 %v1526
      %v1822 = vunpack.c.l.b16 %v1527
      %v1823 = vunpack.c.l.b16 %v1528
      %v1824 = vunpack.c.l.b16 %v1529
      %v1825 = vunpack.c.l.b16 %v1530
      %v1826 = vunpack.c.l.b16 %v1531
      %v1827 = vunpack.c.l.b16 %v1532
      %v1828 = vunpack.c.l.b16 %v1533
      %v1829 = vunpack.c.l.b16 %v1534
      %v1830 = vunpack.c.l.b16 %v1535
      %v1831 = vunpack.c.l.b16 %v1536
      %v1832 = vunpack.c.l.b16 %v1537
      %v1833 = vunpack.c.l.b16 %v1538
      %v1834 = vunpack.c.l.b16 %v1539
      %v1835 = vunpack.c.l.b16 %v1540
      %v1836 = vunpack.c.l.b16 %v1541
      %v1837 = vunpack.c.l.b16 %v1542
      %v1838 = vunpack.c.l.b16 %v1543
      %v1839 = vunpack.c.l.b16 %v1544
      %v1840 = vunpack.c.l.b16 %v1545
      %v1841 = vunpack.c.l.b16 %v1546
      %v1842 = vunpack.c.l.b16 %v1547
      %v1843 = vunpack.c.l.b16 %v1548
      %v1844 = vunpack.c.l.b16 %v1549
      %v1845 = vunpack.c.l.b16 %v1550
      %v1846 = vunpack.c.l.b16 %v1551
      %v1847 = vunpack.c.l.b16 %v1552
      %v1848 = vunpack.c.l.b16 %v1553
      %v1849 = vunpack.c.l.b16 %v1554
      %v1850 = vunpack.c.l.b16 %v1555
      %v1851 = vunpack.c.l.b16 %v1556
      %v1852 = vunpack.c.l.b16 %v1557
      %v1853 = vunpack.c.l.b16 %v1558
      %v1854 = vunpack.c.l.b16 %v1559
      %v1855 = vunpack.c.l.b16 %v1560
      %v1856 = vunpack.c.l.b16 %v1561
      %v1857 = vunpack.c.l.b16 %v1562
      %v1858 = vunpack.c.l.b16 %v1563
      %v1859 = vunpack.c.l.b16 %v1564
      %v1860 = vunpack.c.l.b16 %v1565
      %v1861 = vunpack.c.l.b16 %v1566
      %v1862 = vunpack.c.l.b16 %v1567
      %v1863 = vunpack.c.l.b16 %v1568
      %v1864 = vunpack.c.l.b16 %v1569
      %v1865 = vunpack.c.l.b16 %v1570
      %v1866 = vunpack.c.l.b16 %v1571
      %v1867 = vunpack.c.l.b16 %v1572
      %v1868 = vunpack.c.l.b16 %v1573
      %v1869 = vunpack.c.l.b16 %v1574
      %v1870 = vunpack.c.l.b16 %v1575
      %v1871 = vunpack.c.l.b16 %v1576
      %v1872 = vunpack.c.l.b16 %v1577
      %v1873 = vunpack.c.l.b16 %v1578
      %v1874 = vunpack.c.l.b16 %v1579
      %v1875 = vunpack.c.l.b16 %v1580
      %v1876 = vunpack.c.l.b16 %v1581
      %v1877 = vunpack.c.l.b16 %v1582
      %v1878 = vunpack.c.l.b16 %v1583
      %v1879 = vunpack.c.l.b16 %v1584
      %v1880 = vunpack.c.l.b16 %v1585
      %v1881 = vunpack.c.l.b16 %v1586
      %v1882 = vunpack.c.l.b16 %v1587
      %v1883 = vunpack.c.l.b16 %v1588
      %v1884 = vunpack.c.l.b16 %v1589
      %v1885 = vunpack.c.l.b16 %v1590
      %v1886 = vunpack.c.l.b16 %v1591
      %v1887 = vunpack.c.l.b16 %v1592
      %v1888 = vunpack.c.l.b16 %v1593
      %v1889 = vunpack.c.l.b16 %v1594
      %v1890 = vunpack.c.l.b16 %v1595
      %v1891 = vunpack.c.l.b16 %v1596
      %v1892 = vunpack.c.l.b16 %v1597
      %v1893 = vunpack.c.l.b16 %v1598
      %v1894 = vunpack.c.l.b16 %v1599
      %v1895 = vunpack.c.l.b16 %v1600
      %v1896 = vunpack.c.l.b16 %v1601
      %v1897 = vunpack.c.l.b16 %v1602
      %v1898 = vunpack.c.l.b16 %v1603
      %v1899 = vunpack.c.l.b16 %v1604
      %v1900 = vunpack.c.l.b16 %v1605
      %v1901 = vunpack.c.l.b16 %v1606
      %v1902 = vunpack.c.l.b16 %v1607
      %v1903 = vunpack.c.l.b16 %v1608
      %v1904 = vunpack.c.l.b16 %v1609
      %v1905 = vunpack.c.l.b16 %v1610
      %v1906 = vunpack.c.l.b16 %v1611
      %v1907 = vunpack.c.l.b16 %v1612
      %v1908 = vunpack.c.l.b16 %v1613
      %v1909 = vunpack.c.l.b16 %v1614
      %v1910 = vunpack.c.l.b16 %v1615
      %v1911 = vunpack.c.l.b16 %v1616
      %v1912 = vunpack.c.l.b16 %v1617
      %v1913 = vunpack.c.l.b16 %v1618
      %v1914 = vunpack.c.l.b16 %v1619
      %v1915 = vunpack.c.l.b16 %v1620
      %v1916 = vunpack.c.l.b16 %v1621
      %v1917 = vunpack.c.l.b16 %v1622
      %v1918 = vunpack.c.l.b16 %v1623
      %v1919 = vunpack.c.l.b16 %v1624
      %v1920 = vunpack.c.l.b16 %v1625
      %v1921 = vunpack.c.l.b16 %v1626
      %v1922 = vunpack.c.l.b16 %v1627
      %v1923 = vunpack.c.l.b16 %v1628
      %v1924 = vunpack.c.l.b16 %v1629
      %v1925 = vunpack.c.l.b16 %v1630
      %v1926 = vunpack.c.l.b16 %v1631
      %v1927 = vunpack.c.l.b16 %v1632
      %v1928 = vunpack.c.l.b16 %v1633
      %v1929 = vunpack.c.l.b16 %v1634
      %v1930 = vunpack.c.l.b16 %v1635
      %v1931 = vunpack.c.l.b16 %v1636
      %v1932 = vunpack.c.l.b16 %v1637
      %v1933 = vunpack.c.l.b16 %v1638
      %v1934 = vunpack.c.l.b16 %v1639
      %v1935 = vunpack.c.l.b16 %v1640
      %v1936 = vunpack.c.l.b16 %v1641
      %v1937 = vunpack.c.l.b16 %v1642
      %v1938 = vunpack.c.l.b16 %v1643
      %v1939 = vunpack.c.l.b16 %v1644
      %v1940 = vunpack.c.l.b16 %v1645
      %v1941 = vunpack.c.l.b16 %v1646
      %v1942 = vunpack.c.l.b16 %v1647
      %v1943 = vunpack.c.l.b16 %v1648
      %v1944 = vunpack.c.l.b16 %v1649
      %v1945 = vunpack.c.l.b16 %v1650
      %v1946 = vpack.c.b16 %v1803, %v1802
      %v1947 = vpack.c.b16 %v1805, %v1804
      %v1948 = vpack.c.b16 %v1807, %v1806
      %v1949 = vpack.c.b16 %v1809, %v1808
      %v1950 = vpack.c.b16 %v1811, %v1810
      %v1951 = vpack.c.b16 %v1813, %v1812
      %v1952 = vpack.c.b16 %v1815, %v1814
      %v1953 = vpack.c.b16 %v1817, %v1816
      %v1954 = vpack.c.b16 %v1819, %v1818
      %v1955 = vpack.c.b16 %v1821, %v1820
      %v1956 = vpack.c.b16 %v1823, %v1822
      %v1957 = vpack.c.b16 %v1825, %v1824
      %v1958 = vpack.c.b16 %v1827, %v1826
      %v1959 = vpack.c.b16 %v1829, %v1828
      %v1960 = vpack.c.b16 %v1831, %v1830
      %v1961 = vpack.c.b16 %v1833, %v1832
      %v1962 = vpack.c.b16 %v1835, %v1834
      %v1963 = vpack.c.b16 %v1837, %v1836
      %v1964 = vpack.c.b16 %v1839, %v1838
      %v1965 = vpack.c.b16 %v1841, %v1840
      %v1966 = vpack.c.b16 %v1843, %v1842
      %v1967 = vpack.c.b16 %v1845, %v1844
      %v1968 = vpack.c.b16 %v1847, %v1846
      %v1969 = vpack.c.b16 %v1849, %v1848
      %v1970 = vpack.c.b16 %v1851, %v1850
      %v1971 = vpack.c.b16 %v1853, %v1852
      %v1972 = vpack.c.b16 %v1855, %v1854
      %v1973 = vpack.c.b16 %v1857, %v1856
      %v1974 = vpack.c.b16 %v1859, %v1858
      %v1975 = vpack.c.b16 %v1861, %v1860
      %v1976 = vpack.c.b16 %v1863, %v1862
      %v1977 = vpack.c.b16 %v1865, %v1864
      %v1978 = vpack.c.b16 %v1867, %v1866
      %v1979 = vpack.c.b16 %v1869, %v1868
      %v1980 = vpack.c.b16 %v1871, %v1870
      %v1981 = vpack.c.b16 %v1873, %v1872
      %v1982 = vpack.c.b16 %v1875, %v1874
      %v1983 = vpack.c.b16 %v1877, %v1876
      %v1984 = vpack.c.b16 %v1879, %v1878
      %v1985 = vpack.c.b16 %v1881, %v1880
      %v1986 = vpack.c.b16 %v1883, %v1882
      %v1987 = vpack.c.b16 %v1885, %v1884
      %v1988 = vpack.c.b16 %v1887, %v1886
      %v1989 = vpack.c.b16 %v1889, %v1888
      %v1990 = vpack.c.b16 %v1891, %v1890
      %v1991 = vpack.c.b16 %v1893, %v1892
      %v1992 = vpack.c.b16 %v1895, %v1894
      %v1993 = vpack.c.b16 %v1897, %v1896
      %v1994 = vpack.c.b16 %v1899, %v1898
      %v1995 = vpack.c.b16 %v1901, %v1900
      %v1996 = vpack.c.b16 %v1903, %v1902
      %v1997 = vpack.c.b16 %v1905, %v1904
      %v1998 = vpack.c.b16 %v1907, %v1906
      %v1999 = vpack.c.b16 %v1909, %v1908
      %v2000 = vpack.c.b16 %v1911, %v1910
      %v2001 = vpack.c.b16 %v1913, %v1912
      %v2002 = vpack.c.b16 %v1915, %v1914
      %v2003 = vpack.c.b16 %v1917, %v1916
      %v2004 = vpack.c.b16 %v1919, %v1918
      %v2005 = vpack.c.b16 %v1921, %v1920
      %v2006 = vpack.c.b16 %v1923, %v1922
      %v2007 = vpack.c.b16 %v1925, %v1924
      %v2008 = vpack.c.b16 %v1927, %v1926
      %v2009 = vpack.c.b16 %v1929, %v1928
      %v2010 = vpack.c.b16 %v1931, %v1930
      %v2011 = vpack.c.b16 %v1933, %v1932
      %v2012 = vpack.c.b16 %v1935, %v1934
      %v2013 = vpack.c.b16 %v1937, %v1936
      %v2014 = vpack.c.b16 %v1939, %v1938
      %v2015 = vpack.c.b16 %v1941, %v1940
      %v2016 = vpack.c.b16 %v1943, %v1942
      %v2017 = vpack.c.b16 %v1945, %v1944
      %2090 = vmatprep.subr.bf16.mxu0 0
      %2091 = vmatpush1.bf16.msra.mxu0 %v1946
      %2092 = vmatprep.subr.bf16.mxu0 0
      %2093 = vmatpush1.bf16.msra.mxu0 %v1947
      %2094 = vmatprep.subr.bf16.mxu0 0
      %2095 = vmatpush1.bf16.msra.mxu0 %v1948
      %2096 = vmatprep.subr.bf16.mxu0 0
      %2097 = vmatpush1.bf16.msra.mxu0 %v1949
      %2098 = vmatprep.subr.bf16.mxu0 0
      %2099 = vmatpush1.bf16.msra.mxu0 %v1950
      %2100 = vmatprep.subr.bf16.mxu0 0
      %2101 = vmatpush1.bf16.msra.mxu0 %v1951
      %2102 = vmatprep.subr.bf16.mxu0 0
      %2103 = vmatpush1.bf16.msra.mxu0 %v1952
      %2104 = vmatprep.subr.bf16.mxu0 0
      %2105 = vmatpush1.bf16.msra.mxu0 %v1953
      %2106 = vmatprep.subr.bf16.mxu0 0
      %2107 = vmatpush1.bf16.msra.mxu0 %v1954
      %2108 = vmatprep.subr.bf16.mxu0 0
      %2109 = vmatpush1.bf16.msra.mxu0 %v1955
      %2110 = vmatprep.subr.bf16.mxu0 0
      %2111 = vmatpush1.bf16.msra.mxu0 %v1956
      %2112 = vmatprep.subr.bf16.mxu0 0
      %2113 = vmatpush1.bf16.msra.mxu0 %v1957
      %2114 = vmatprep.subr.bf16.mxu0 0
      %2115 = vmatpush1.bf16.msra.mxu0 %v1958
      %2116 = vmatprep.subr.bf16.mxu0 0
      %2117 = vmatpush1.bf16.msra.mxu0 %v1959
      %2118 = vmatprep.subr.bf16.mxu0 0
      %2119 = vmatpush1.bf16.msra.mxu0 %v1960
      %2120 = vmatprep.subr.bf16.mxu0 0
      %2121 = vmatpush1.bf16.msra.mxu0 %v1961
      %2122 = vmatprep.mubr.bf16.mxu0 %v1499
      %2123 = vmatmul.mubr.bf16.gmra.mrb[0].mxu0 %v1498
      %v2124 = vpop.f32.mrb[0].mxu0
      %v2125 = vadd.f32 %v1656, %v2124
      %v2126 = vpop.f32.mrb[0].mxu0
      %v2127 = vpop.f32.mrb[0].mxu0
      %v2128 = vadd.f32 %v1656, %v2127
      %v2129 = vpop.f32.mrb[0].mxu0
      %2130 = vdwg.mxu0
      %2131 = vmatprep.subr.bf16.mxu0 0
      %2132 = vmatpush1.bf16.msra.mxu0 %v1962
      %2133 = vmatprep.subr.bf16.mxu0 0
      %2134 = vmatpush1.bf16.msra.mxu0 %v1963
      %2135 = vmatprep.subr.bf16.mxu0 0
      %2136 = vmatpush1.bf16.msra.mxu0 %v1964
      %2137 = vmatprep.subr.bf16.mxu0 0
      %2138 = vmatpush1.bf16.msra.mxu0 %v1965
      %2139 = vmatprep.subr.bf16.mxu0 0
      %2140 = vmatpush1.bf16.msra.mxu0 %v1966
      %2141 = vmatprep.subr.bf16.mxu0 0
      %2142 = vmatpush1.bf16.msra.mxu0 %v1967
      %2143 = vmatprep.subr.bf16.mxu0 0
      %2144 = vmatpush1.bf16.msra.mxu0 %v1968
      %2145 = vmatprep.subr.bf16.mxu0 0
      %2146 = vmatpush1.bf16.msra.mxu0 %v1969
      %2147 = vmatprep.subr.bf16.mxu0 0
      %2148 = vmatpush1.bf16.msra.mxu0 %v1970
      %2149 = vmatprep.subr.bf16.mxu0 0
      %2150 = vmatpush1.bf16.msra.mxu0 %v1971
      %2151 = vmatprep.subr.bf16.mxu0 0
      %2152 = vmatpush1.bf16.msra.mxu0 %v1972
      %2153 = vmatprep.subr.bf16.mxu0 0
      %2154 = vmatpush1.bf16.msra.mxu0 %v1973
      %2155 = vmatprep.subr.bf16.mxu0 0
      %2156 = vmatpush1.bf16.msra.mxu0 %v1974
      %2157 = vmatprep.subr.bf16.mxu0 0
      %2158 = vmatpush1.bf16.msra.mxu0 %v1975
      %2159 = vmatprep.subr.bf16.mxu0 0
      %2160 = vmatpush1.bf16.msra.mxu0 %v1976
      %2161 = vmatprep.subr.bf16.mxu0 0
      %2162 = vmatpush1.bf16.msra.mxu0 %v1977
      %2163 = vmatprep.mubr.bf16.mxu0 %v1501
      %2164 = vmatmul.mubr.bf16.gmra.mrb[0].mxu0 %v1500
      %v2165 = vpop.f32.mrb[0].mxu0
      %v2166 = vadd.f32 %v2125, %v2165
      %v2167 = vpop.f32.mrb[0].mxu0
      %v2168 = vpop.f32.mrb[0].mxu0
      %v2169 = vadd.f32 %v2128, %v2168
      %v2170 = vpop.f32.mrb[0].mxu0
      %2171 = vdwg.mxu0
      %2172 = vmatprep.subr.bf16.mxu0 0
      %2173 = vmatpush1.bf16.msra.mxu0 %v1978
      %2174 = vmatprep.subr.bf16.mxu0 0
      %2175 = vmatpush1.bf16.msra.mxu0 %v1979
      %2176 = vmatprep.subr.bf16.mxu0 0
      %2177 = vmatpush1.bf16.msra.mxu0 %v1980
      %2178 = vmatprep.subr.bf16.mxu0 0
      %2179 = vmatpush1.bf16.msra.mxu0 %v1981
      %2180 = vmatprep.subr.bf16.mxu0 0
      %2181 = vmatpush1.bf16.msra.mxu0 %v1982
      %2182 = vmatprep.subr.bf16.mxu0 0
      %2183 = vmatpush1.bf16.msra.mxu0 %v1983
      %2184 = vmatprep.subr.bf16.mxu0 0
      %2185 = vmatpush1.bf16.msra.mxu0 %v1984
      %2186 = vmatprep.subr.bf16.mxu0 0
      %2187 = vmatpush1.bf16.msra.mxu0 %v1985
      %2188 = vmatprep.subr.bf16.mxu0 0
      %2189 = vmatpush1.bf16.msra.mxu0 %v1986
      %2190 = vmatprep.subr.bf16.mxu0 0
      %2191 = vmatpush1.bf16.msra.mxu0 %v1987
      %2192 = vmatprep.subr.bf16.mxu0 0
      %2193 = vmatpush1.bf16.msra.mxu0 %v1988
      %2194 = vmatprep.subr.bf16.mxu0 0
      %2195 = vmatpush1.bf16.msra.mxu0 %v1989
      %2196 = vmatprep.subr.bf16.mxu0 0
      %2197 = vmatpush1.bf16.msra.mxu0 %v1990
      %2198 = vmatprep.subr.bf16.mxu0 0
      %2199 = vmatpush1.bf16.msra.mxu0 %v1991
      %2200 = vmatprep.subr.bf16.mxu0 0
      %2201 = vmatpush1.bf16.msra.mxu0 %v1992
      %2202 = vmatprep.subr.bf16.mxu0 0
      %2203 = vmatpush1.bf16.msra.mxu0 %v1993
      %2204 = vmatprep.mubr.bf16.mxu0 %v1503
      %2205 = vmatmul.mubr.bf16.gmra.mrb[0].mxu0 %v1502
      %v2206 = vpop.f32.mrb[0].mxu0
      %v2207 = vadd.f32 %v2166, %v2206
      %v2208 = vpop.f32.mrb[0].mxu0
      %v2209 = vpop.f32.mrb[0].mxu0
      %v2210 = vadd.f32 %v2169, %v2209
      %v2211 = vpop.f32.mrb[0].mxu0
      %2212 = vdwg.mxu0
      %2213 = vmatprep.subr.bf16.mxu0 0
      %2214 = vmatpush1.bf16.msra.mxu0 %v1994
      %2215 = vmatprep.subr.bf16.mxu0 0
      %2216 = vmatpush1.bf16.msra.mxu0 %v1995
      %2217 = vmatprep.subr.bf16.mxu0 0
      %2218 = vmatpush1.bf16.msra.mxu0 %v1996
      %2219 = vmatprep.subr.bf16.mxu0 0
      %2220 = vmatpush1.bf16.msra.mxu0 %v1997
      %2221 = vmatprep.subr.bf16.mxu0 0
      %2222 = vmatpush1.bf16.msra.mxu0 %v1998
      %2223 = vmatprep.subr.bf16.mxu0 0
      %2224 = vmatpush1.bf16.msra.mxu0 %v1999
      %2225 = vmatprep.subr.bf16.mxu0 0
      %2226 = vmatpush1.bf16.msra.mxu0 %v2000
      %2227 = vmatprep.subr.bf16.mxu0 0
      %2228 = vmatpush1.bf16.msra.mxu0 %v2001
      %2229 = vmatprep.subr.bf16.mxu0 0
      %2230 = vmatpush1.bf16.msra.mxu0 %v2002
      %2231 = vmatprep.subr.bf16.mxu0 0
      %2232 = vmatpush1.bf16.msra.mxu0 %v2003
      %2233 = vmatprep.subr.bf16.mxu0 0
      %2234 = vmatpush1.bf16.msra.mxu0 %v2004
      %2235 = vmatprep.subr.bf16.mxu0 0
      %2236 = vmatpush1.bf16.msra.mxu0 %v2005
      %2237 = vmatprep.subr.bf16.mxu0 0
      %2238 = vmatpush1.bf16.msra.mxu0 %v2006
      %2239 = vmatprep.subr.bf16.mxu0 0
      %2240 = vmatpush1.bf16.msra.mxu0 %v2007
      %2241 = vmatprep.subr.bf16.mxu0 0
      %2242 = vmatpush1.bf16.msra.mxu0 %v2008
      %2243 = vmatprep.subr.bf16.mxu0 0
      %2244 = vmatpush1.bf16.msra.mxu0 %v2009
      %2245 = vmatprep.mubr.bf16.mxu0 %v1505
      %2246 = vmatmul.mubr.bf16.gmra.mrb[0].mxu0 %v1504
      %v2247 = vpop.f32.mrb[0].mxu0
      %v2248 = vadd.f32 %v2207, %v2247
      %v2249 = vpop.f32.mrb[0].mxu0
      %v2250 = vpop.f32.mrb[0].mxu0
      %v2251 = vadd.f32 %v2210, %v2250
      %v2252 = vpop.f32.mrb[0].mxu0
      %2253 = vdwg.mxu0
      %2254 = vmatprep.subr.bf16.mxu0 0
      %2255 = vmatpush1.bf16.msra.mxu0 %v2010
      %2256 = vmatprep.subr.bf16.mxu0 0
      %2257 = vmatpush1.bf16.msra.mxu0 %v2011
      %2258 = vmatprep.subr.bf16.mxu0 0
      %2259 = vmatpush1.bf16.msra.mxu0 %v2012
      %2260 = vmatprep.subr.bf16.mxu0 0
      %2261 = vmatpush1.bf16.msra.mxu0 %v2013
      %2262 = vmatprep.subr.bf16.mxu0 0
      %2263 = vmatpush1.bf16.msra.mxu0 %v2014
      %2264 = vmatprep.subr.bf16.mxu0 0
      %2265 = vmatpush1.bf16.msra.mxu0 %v2015
      %2266 = vmatprep.subr.bf16.mxu0 0
      %2267 = vmatpush1.bf16.msra.mxu0 %v2016
      %2268 = vmatprep.subr.bf16.mxu0 0
      %2269 = vmatpush1.bf16.msra.mxu0 %v2017
      %2270 = vmatprep.subr.bf16.mxu0 0
      %2271 = vmatpush1.bf16.msra.mxu0 0
      %2272 = vmatprep.subr.bf16.mxu0 0
      %2273 = vmatpush1.bf16.msra.mxu0 0
      %2274 = vmatprep.subr.bf16.mxu0 0
      %2275 = vmatpush1.bf16.msra.mxu0 0
      %2276 = vmatprep.subr.bf16.mxu0 0
      %2277 = vmatpush1.bf16.msra.mxu0 0
      %2278 = vmatprep.subr.bf16.mxu0 0
      %2279 = vmatpush1.bf16.msra.mxu0 0
      %2280 = vmatprep.subr.bf16.mxu0 0
      %2281 = vmatpush1.bf16.msra.mxu0 0
      %2282 = vmatprep.subr.bf16.mxu0 0
      %2283 = vmatpush1.bf16.msra.mxu0 0
      %2284 = vmatprep.subr.bf16.mxu0 0
      %2285 = vmatpush1.bf16.msra.mxu0 0
      %2286 = vmatprep.mubr.bf16.mxu0 0
      %2287 = vmatmul.mubr.bf16.gmra.mrb[0].mxu0 %v1506
      %v2288 = vpop.f32.mrb[0].mxu0
      %v2289 = vadd.f32 %v2248, %v2288
      %v2290 = vpop.f32.mrb[0].mxu0
      %v2291 = vpop.f32.mrb[0].mxu0
      %v2292 = vadd.f32 %v2251, %v2291
      %v2293 = vpop.f32.mrb[0].mxu0
      %2294 = vdwg.mxu0
      %v2295 = vadd.f32 %v2289, %v247
      %v2296 = vadd.f32 %v2292, %v248
      %2297 = vst [vmem:[%s224] sm:$0xff] %v2295
      %2298 = vst [vmem:[%s224 + $0x8] sm:$0xff] %v2296
      %p2299 = scmp.lt.s32.totalorder %s16, 1
      %s2300 = scalar_select %p2299, %s16, 1
      %s2301 = smul.addr %s2300, 2
      %s2302 = smul.addr %s2301, 8
      %s2303 = scalar_lea.vmem %s5, %s2302
      // Predicated region
      $region41: #{basic_block_forward.1} parent=39 // pred_check
        %p2304 = pneg %p144
      $region42: #{basic_block_forward.1} parent=39 // pred_check_branch
        %2306 = sbr.rel (%p2304) target = $region44
      $region43: #{basic_block_forward.1} parent=39 // pred_region
        _
      $region44: #{basic_block_forward.1} parent=39 // pred_fallthru
        _
    $region40: #{basic_block_forward.1} parent=5 // pred_fallthru
      _
    %p2307 = scmp.le.s32.totalorder 2, %s11
    // Predicated region
    $region45: #{basic_block_forward.1} parent=5 // pred_check
      %p2308 = pneg %p2307
    $region46: #{basic_block_forward.1} parent=5 // pred_check_branch
      %2310 = sbr.rel (%p2308) target = $region48
    $region47: #{basic_block_forward.1} parent=5 // pred_region
      %s2311 = ssub.s32 %s11, 2
      // Predicated region
      $region49: #{basic_block_forward.1} parent=47 // pred_check
        %p2312 = pneg %p150
      $region50: #{basic_block_forward.1} parent=47 // pred_check_branch
        %2314 = sbr.rel (%p2312) target = $region52
      $region51: #{basic_block_forward.1} parent=47 // pred_region
        %p2315 = scmp.lt.s32.totalorder %s17, 1
        %s2316 = scalar_select %p2315, %s17, 1
        %s2317 = smul.addr %s2316, 2
        %s2318 = smul.addr %s2317, 8
        %s2319 = scalar_lea.vmem %s5, %s2318
      $region52: #{basic_block_forward.1} parent=47 // pred_fallthru
        _
    $region48: #{basic_block_forward.1} parent=5 // pred_fallthru
      _
  $region6: #{basic_block_forward.1} parent=0 // loop_footer
    %s15 = sadd.s32 1, %s11
  $region7: #{basic_block_forward.1} parent=0 // loop_footer_branch
    %10 = sbr.rel target = $region3
  $region8: #{basic_block_forward.1} parent=0 // loop_exit
    _

</llo_original>
